<compile_context>
chip_gen: v7x
topology: tpu7x:2x2x1
jax: 0.10.0
libtpu: 0.0.40
codegen_flags: <defaults>
</compile_context>

<pallas_src>
import functools

import jax
import jax.numpy as jnp
from jax.experimental import pallas as pl
from jax.experimental.pallas import tpu as pltpu


# -----------------------------------------------------------------------------
# Kernels
# -----------------------------------------------------------------------------

def _attn_ln_kernel(x_ref, wq_ref, wk_ref, wv_ref, wo_ref,
                    bq_ref, bk_ref, bv_ref, bo_ref, rel_ref,
                    g_ref, b_ref, out_ref, acc_ref, *, eps):
    """One (batch, head) step of rel-pos self-attention, with fused
    residual + LayerNorm epilogue on the last head."""
    h = pl.program_id(1)
    n_heads = pl.num_programs(1)

    @pl.when(h == 0)
    def _():
        acc_ref[...] = jnp.zeros_like(acc_ref)

    x = x_ref[0]                                   # (S, D), input dtype
    xb = x.astype(jnp.bfloat16)                    # bf16 into the MXU
    dh = wq_ref.shape[-1]
    scale = 1.0 / float(dh) ** 0.5

    # Per-head projections: (S, D) @ (D, dh) -> (S, dh), f32 accumulation.
    q = jnp.dot(xb, wq_ref[0], preferred_element_type=jnp.float32) + bq_ref[0]
    k = jnp.dot(xb, wk_ref[0], preferred_element_type=jnp.float32) + bk_ref[0]
    v = jnp.dot(xb, wv_ref[0], preferred_element_type=jnp.float32) + bv_ref[0]
    q = q * scale                                  # fold 1/sqrt(dh) into q

    qb = q.astype(jnp.bfloat16)
    kb = k.astype(jnp.bfloat16)
    vb = v.astype(jnp.bfloat16)

    # Scores for this head: (S, S) = q @ k^T (no explicit transpose).
    s = jax.lax.dot_general(qb, kb, (((1,), (1,)), ((), ())),
                            preferred_element_type=jnp.float32)
    s = s + rel_ref[0]                             # (S, S) rel-pos bias tile
    s = s - jnp.max(s, axis=-1, keepdims=True)
    p = jnp.exp(s)
    p = p * pl.reciprocal(jnp.sum(p, axis=-1, keepdims=True), approx=True)

    # Context and its contribution to the output projection.
    ctx = jnp.dot(p.astype(jnp.bfloat16), vb, preferred_element_type=jnp.float32)
    acc_ref[...] += jnp.dot(ctx.astype(jnp.bfloat16), wo_ref[0],
                            preferred_element_type=jnp.float32)

    # Fused residual + LayerNorm epilogue on the last head.
    @pl.when(h == n_heads - 1)
    def _():
        z = x.astype(jnp.float32) + acc_ref[...] + bo_ref[...]
        mean = jnp.mean(z, axis=-1, keepdims=True)
        zc = z - mean
        var = jnp.mean(zc * zc, axis=-1, keepdims=True)
        zn = zc * jax.lax.rsqrt(var + eps)
        out_ref[0] = (zn * g_ref[...] + b_ref[...]).astype(out_ref.dtype)


def _ffn_ln_kernel(x_ref, w1_ref, b1_ref, w2_ref, b2_ref, g_ref, b_ref,
                   out_ref, *, eps):
    """out = LayerNorm(x + relu(x @ W1 + b1) @ W2 + b2) over row tiles."""
    x = x_ref[...]                                 # (tr, D)
    xb = x.astype(jnp.bfloat16)
    h = jnp.dot(xb, w1_ref[...], preferred_element_type=jnp.float32) + b1_ref[...]
    h = jnp.maximum(h, 0.0)
    y = jnp.dot(h.astype(jnp.bfloat16), w2_ref[...],
                preferred_element_type=jnp.float32) + b2_ref[...]
    z = x.astype(jnp.float32) + y
    mean = jnp.mean(z, axis=-1, keepdims=True)
    zc = z - mean
    var = jnp.mean(zc * zc, axis=-1, keepdims=True)
    zn = zc * jax.lax.rsqrt(var + eps)
    out_ref[...] = (zn * g_ref[...] + b_ref[...]).astype(out_ref.dtype)
    # TODO(synk): for large DFF, add a DFF-tiled grid axis with an f32 accumulator.


# -----------------------------------------------------------------------------
# Wrappers (pallas_call plumbing)
# -----------------------------------------------------------------------------

_VMEM_LIMIT = 32 * 1024 * 1024


def _pick_row_tile(n):
    for t in (512, 256, 128, 64, 32, 16, 8):
        if n % t == 0:
            return t
    return n


def attn_ln_block(x, p, rel_bias, gamma, beta, num_heads, eps=1e-5):
    """Fused: LayerNorm(x + RelPosSelfAttention(x))."""
    B, S, D = x.shape
    dh = D // num_heads
    bf16 = jnp.bfloat16

    # Per-head weight tiles: (H, D, dh) / (H, dh, D), biases (H, 1, dh).
    wq = p["wq"].reshape(D, num_heads, dh).transpose(1, 0, 2).astype(bf16)
    wk = p["wk"].reshape(D, num_heads, dh).transpose(1, 0, 2).astype(bf16)
    wv = p["wv"].reshape(D, num_heads, dh).transpose(1, 0, 2).astype(bf16)
    wo = p["wo"].reshape(num_heads, dh, D).astype(bf16)
    bq = p["bq"].reshape(1, num_heads, dh).transpose(1, 0, 2)
    bk = p["bk"].reshape(1, num_heads, dh).transpose(1, 0, 2)
    bv = p["bv"].reshape(1, num_heads, dh).transpose(1, 0, 2)
    bo = p["bo"]                                   # (1, D)

    def full(a):
        nd = a.ndim
        return pl.BlockSpec(a.shape, lambda b, h, _nd=nd: (0,) * _nd)

    def per_head(a):
        nd = a.ndim
        return pl.BlockSpec((1,) + a.shape[1:],
                            lambda b, h, _nd=nd: (h,) + (0,) * (_nd - 1))

    return pl.pallas_call(
        functools.partial(_attn_ln_kernel, eps=eps),
        out_shape=jax.ShapeDtypeStruct((B, S, D), x.dtype),
        grid=(B, num_heads),
        in_specs=[
            pl.BlockSpec((1, S, D), lambda b, h: (b, 0, 0)),   # x (resident over h)
            per_head(wq), per_head(wk), per_head(wv), per_head(wo),
            per_head(bq), per_head(bk), per_head(bv),
            full(bo), per_head(rel_bias),
            full(gamma), full(beta),
        ],
        out_specs=pl.BlockSpec((1, S, D), lambda b, h: (b, 0, 0)),
        scratch_shapes=[pltpu.VMEM((S, D), jnp.float32)],       # head accumulator
        compiler_params=pltpu.CompilerParams(
            dimension_semantics=("parallel", "arbitrary"),
            vmem_limit_bytes=_VMEM_LIMIT),
    )(x, wq, wk, wv, wo, bq, bk, bv, bo, rel_bias, gamma, beta)


def ffn_ln_block(x, w1, b1, w2, b2, gamma, beta, eps=1e-5):
    """Fused: LayerNorm(x + FFN(x)), gridding over row tiles of B*S."""
    B, S, D = x.shape
    R = B * S
    x2 = x.reshape(R, D)
    tr = _pick_row_tile(R)
    w1b = w1.astype(jnp.bfloat16)
    w2b = w2.astype(jnp.bfloat16)

    def full(a):
        nd = a.ndim
        return pl.BlockSpec(a.shape, lambda r, _nd=nd: (0,) * _nd)

    out2 = pl.pallas_call(
        functools.partial(_ffn_ln_kernel, eps=eps),
        out_shape=jax.ShapeDtypeStruct((R, D), x.dtype),
        grid=(R // tr,),
        in_specs=[pl.BlockSpec((tr, D), lambda r: (r, 0)),
                  full(w1b), full(b1), full(w2b), full(b2),
                  full(gamma), full(beta)],
        out_specs=pl.BlockSpec((tr, D), lambda r: (r, 0)),
        compiler_params=pltpu.CompilerParams(
            dimension_semantics=("parallel",),
            vmem_limit_bytes=_VMEM_LIMIT),
    )(x2, w1b, b1, w2b, b2, gamma, beta)
    return out2.reshape(B, S, D)


# -----------------------------------------------------------------------------
# Parameter init + full decoder-layer forward
# -----------------------------------------------------------------------------

def init_attn_params(key, d_model, num_heads, max_seq):
    ks = jax.random.split(key, 5)
    std = 0.02
    return {
        "wq": std * jax.random.normal(ks[0], (d_model, d_model), jnp.float32),
        "wk": std * jax.random.normal(ks[1], (d_model, d_model), jnp.float32),
        "wv": std * jax.random.normal(ks[2], (d_model, d_model), jnp.float32),
        "wo": std * jax.random.normal(ks[3], (d_model, d_model), jnp.float32),
        "bq": jnp.zeros((1, d_model), jnp.float32),
        "bk": jnp.zeros((1, d_model), jnp.float32),
        "bv": jnp.zeros((1, d_model), jnp.float32),
        "bo": jnp.zeros((1, d_model), jnp.float32),
        # Shaw-style relative-position embedding table: (2*max_seq-1, H)
        "rel_table": std * jax.random.normal(
            ks[4], (2 * max_seq - 1, num_heads), jnp.float32),
    }


def init_decoder_params(key, d_model, num_heads, dim_feedforward, max_seq):
    ks = jax.random.split(key, 4)
    std = 0.02
    return {
        "self_attn": init_attn_params(ks[0], d_model, num_heads, max_seq),
        "multihead_attn": init_attn_params(ks[1], d_model, num_heads, max_seq),
        "w1": std * jax.random.normal(ks[2], (d_model, dim_feedforward), jnp.float32),
        "b1": jnp.zeros((1, dim_feedforward), jnp.float32),
        "w2": std * jax.random.normal(ks[3], (dim_feedforward, d_model), jnp.float32),
        "b2": jnp.zeros((1, d_model), jnp.float32),
        "norm1_g": jnp.ones((1, d_model), jnp.float32),
        "norm1_b": jnp.zeros((1, d_model), jnp.float32),
        "norm2_g": jnp.ones((1, d_model), jnp.float32),
        "norm2_b": jnp.zeros((1, d_model), jnp.float32),
        "norm3_g": jnp.ones((1, d_model), jnp.float32),
        "norm3_b": jnp.zeros((1, d_model), jnp.float32),
    }


def build_rel_bias(rel_table, seq_len):
    """(2L-1, H) table -> (H, S, S) additive bias, bias[h,i,j]=table[i-j+L-1,h]."""
    idx = (jnp.arange(seq_len)[:, None] - jnp.arange(seq_len)[None, :]
           + seq_len - 1)                          # (S, S)
    bias = rel_table[idx]                          # (S, S, H)  (glue gather, XLA)
    return jnp.transpose(bias, (2, 0, 1))          # (H, S, S)


def custom_decoder_layer(tgt, memory, params, num_heads):
    """Forward of CustomDecoderLayer. `memory` is unused (matches reference)."""
    del memory
    B, S, D = tgt.shape

    # self-attn block (attention + residual + norm1 fused)
    rel1 = build_rel_bias(params["self_attn"]["rel_table"], S)
    t = attn_ln_block(tgt, params["self_attn"], rel1,
                      params["norm1_g"], params["norm1_b"], num_heads)

    # "multihead_attn" block (also self-attention on tgt in the reference)
    rel2 = build_rel_bias(params["multihead_attn"]["rel_table"], S)
    t = attn_ln_block(t, params["multihead_attn"], rel2,
                      params["norm2_g"], params["norm2_b"], num_heads)

    # feed-forward block (FFN + residual + norm3 fused)
    t = ffn_ln_block(t, params["w1"], params["b1"], params["w2"], params["b2"],
                     params["norm3_g"], params["norm3_b"])
    return t


# -----------------------------------------------------------------------------
# Pure-JAX f32 reference for sanity checking
# -----------------------------------------------------------------------------

def _ref_attn(x, p, num_heads):
    B, S, D = x.shape
    dh = D // num_heads
    q = x @ p["wq"] + p["bq"]
    k = x @ p["wk"] + p["bk"]
    v = x @ p["wv"] + p["bv"]
    q = q.reshape(B, S, num_heads, dh).transpose(0, 2, 1, 3)
    k = k.reshape(B, S, num_heads, dh).transpose(0, 2, 1, 3)
    v = v.reshape(B, S, num_heads, dh).transpose(0, 2, 1, 3)
    s = jnp.einsum("bhqd,bhkd->bhqk", q, k) / (dh ** 0.5)
    s = s + build_rel_bias(p["rel_table"], S)[None]
    a = jax.nn.softmax(s, axis=-1)
    ctx = jnp.einsum("bhqk,bhkd->bhqd", a, v).transpose(0, 2, 1, 3).reshape(B, S, D)
    return ctx @ p["wo"] + p["bo"]


def _ref_ln(z, g, b, eps=1e-5):
    m = jnp.mean(z, axis=-1, keepdims=True)
    v = jnp.mean((z - m) ** 2, axis=-1, keepdims=True)
    return (z - m) * jax.lax.rsqrt(v + eps) * g + b


def reference_forward(tgt, memory, params, num_heads):
    del memory
    t = _ref_ln(tgt + _ref_attn(tgt, params["self_attn"], num_heads),
                params["norm1_g"], params["norm1_b"])
    t = _ref_ln(t + _ref_attn(t, params["multihead_attn"], num_heads),
                params["norm2_g"], params["norm2_b"])
    ff = jnp.maximum(t @ params["w1"] + params["b1"], 0.0) @ params["w2"] + params["b2"]
    return _ref_ln(t + ff, params["norm3_g"], params["norm3_b"])


# -----------------------------------------------------------------------------
# Main
# -----------------------------------------------------------------------------

if __name__ == "__main__":
    # Small but lane-dense shapes: D multiple of 128, S multiple of 8.
    B, S, D, H, DFF = 2, 16, 128, 4, 256

    key = jax.random.PRNGKey(0)
    k_tgt, k_mem, k_par = jax.random.split(key, 3)
    tgt = jax.random.normal(k_tgt, (B, S, D), jnp.float32)
    memory = jax.random.normal(k_mem, (B, S, D), jnp.float32)  # unused by forward
    params = init_decoder_params(k_par, D, H, DFF, max_seq=S)

    out = custom_decoder_layer(tgt, memory, params, num_heads=H)
    out = jax.block_until_ready(out)

    ref = reference_forward(tgt, memory, params, num_heads=H)
    assert out.shape == (B, S, D)
    # bf16 MXU inputs + approx reciprocal vs f32 reference -> relaxed tolerance.
    assert jnp.max(jnp.abs(out - ref)) < 5e-2

    print("KERNEL_OK")
</pallas_src>

<mosaic_0001>
module attributes {stable_mosaic.version = 11 : i64} {
  func.func @_attn_ln_kernel(%arg0: i32, %arg1: i32, %arg2: memref<1x16x128xf32, #tpu.memory_space<vmem>>, %arg3: memref<1x128x32xbf16, #tpu.memory_space<vmem>>, %arg4: memref<1x128x32xbf16, #tpu.memory_space<vmem>>, %arg5: memref<1x128x32xbf16, #tpu.memory_space<vmem>>, %arg6: memref<1x32x128xbf16, #tpu.memory_space<vmem>>, %arg7: memref<1x1x32xf32, #tpu.memory_space<vmem>>, %arg8: memref<1x1x32xf32, #tpu.memory_space<vmem>>, %arg9: memref<1x1x32xf32, #tpu.memory_space<vmem>>, %arg10: memref<1x128xf32, #tpu.memory_space<vmem>>, %arg11: memref<1x16x16xf32, #tpu.memory_space<vmem>>, %arg12: memref<1x128xf32, #tpu.memory_space<vmem>>, %arg13: memref<1x128xf32, #tpu.memory_space<vmem>>, %arg14: memref<1x16x128xf32, #tpu.memory_space<vmem>>, %arg15: memref<16x128xf32, #tpu.memory_space<vmem>>) attributes {dimension_semantics = [#tpu.dimension_semantics<parallel>, #tpu.dimension_semantics<arbitrary>], iteration_bounds = array<i64: 2, 4>, scalar_prefetch = 0 : i64, scratch_operands = 1 : i64, tpu.core_type = #tpu.core_type<tc>, window_params = [{transform_indices = @transform_0, window_bounds = array<i64: 1, 16, 128>}, {transform_indices = @transform_1, window_bounds = array<i64: 1, 128, 32>}, {transform_indices = @transform_2, window_bounds = array<i64: 1, 128, 32>}, {transform_indices = @transform_3, window_bounds = array<i64: 1, 128, 32>}, {transform_indices = @transform_4, window_bounds = array<i64: 1, 32, 128>}, {transform_indices = @transform_5, window_bounds = array<i64: 1, 1, 32>}, {transform_indices = @transform_6, window_bounds = array<i64: 1, 1, 32>}, {transform_indices = @transform_7, window_bounds = array<i64: 1, 1, 32>}, {pipeline_mode = #tpu.pipeline_mode<synchronous>, transform_indices = @transform_8, window_bounds = array<i64: 1, 128>}, {transform_indices = @transform_9, window_bounds = array<i64: 1, 16, 16>}, {pipeline_mode = #tpu.pipeline_mode<synchronous>, transform_indices = @transform_10, window_bounds = array<i64: 1, 128>}, {pipeline_mode = #tpu.pipeline_mode<synchronous>, transform_indices = @transform_11, window_bounds = array<i64: 1, 128>}, {transform_indices = @transform_12, window_bounds = array<i64: 1, 16, 128>}]} {
    %c0_i32 = arith.constant 0 : i32
    %0 = arith.cmpi eq, %arg1, %c0_i32 : i32
    %1 = arith.extui %0 : i1 to i32
    %c0_i32_0 = arith.constant 0 : i32
    %2 = arith.cmpi ne, %1, %c0_i32_0 : i32
    scf.if %2 {
      %cst_40 = arith.constant 0.000000e+00 : f32
      %58 = vector.broadcast %cst_40 : f32 to vector<16x128xf32>
      %c0_41 = arith.constant 0 : index
      %c0_42 = arith.constant 0 : index
      %59 = vector.load %arg15[%c0_41, %c0_42] : memref<16x128xf32, #tpu.memory_space<vmem>>, vector<16x128xf32>
      tpu.vector_store %arg15[%c0_41, %c0_42], %58 {strides = array<i32>} : memref<16x128xf32, #tpu.memory_space<vmem>>, vector<16x128xf32>,
    } else {
    }
    %c0 = arith.constant 0 : index
    %c0_1 = arith.constant 0 : index
    %c0_2 = arith.constant 0 : index
    %3 = vector.load %arg2[%c0, %c0_1, %c0_2] : memref<1x16x128xf32, #tpu.memory_space<vmem>>, vector<1x16x128xf32>
    %4 = vector.shape_cast %3 : vector<1x16x128xf32> to vector<16x128xf32>
    %5 = arith.truncf %4 : vector<16x128xf32> to vector<16x128xbf16>
    %c0_3 = arith.constant 0 : index
    %c0_4 = arith.constant 0 : index
    %c0_5 = arith.constant 0 : index
    %6 = vector.load %arg3[%c0_3, %c0_4, %c0_5] : memref<1x128x32xbf16, #tpu.memory_space<vmem>>, vector<1x128x32xbf16>
    %7 = vector.shape_cast %6 : vector<1x128x32xbf16> to vector<128x32xbf16>
    %cst = arith.constant dense<0.000000e+00> : vector<16x32xf32>
    %8 = tpu.matmul %5, %7, %cst {dimension_numbers = #tpu.dot_dimension_numbers<[1], [0], [0], [1], [0, 0, 1, 1], [], []>} : vector<16x128xbf16>, vector<128x32xbf16>, vector<16x32xf32> -> vector<16x32xf32>
    %c0_6 = arith.constant 0 : index
    %c0_7 = arith.constant 0 : index
    %c0_8 = arith.constant 0 : index
    %9 = vector.load %arg7[%c0_6, %c0_7, %c0_8] : memref<1x1x32xf32, #tpu.memory_space<vmem>>, vector<1x1x32xf32>
    %10 = vector.shape_cast %9 : vector<1x1x32xf32> to vector<1x32xf32>
    %11 = vector.broadcast %10 : vector<1x32xf32> to vector<16x32xf32>
    %12 = arith.addf %8, %11 : vector<16x32xf32>
    %c0_9 = arith.constant 0 : index
    %c0_10 = arith.constant 0 : index
    %c0_11 = arith.constant 0 : index
    %13 = vector.load %arg4[%c0_9, %c0_10, %c0_11] : memref<1x128x32xbf16, #tpu.memory_space<vmem>>, vector<1x128x32xbf16>
    %14 = vector.shape_cast %13 : vector<1x128x32xbf16> to vector<128x32xbf16>
    %cst_12 = arith.constant dense<0.000000e+00> : vector<16x32xf32>
    %15 = tpu.matmul %5, %14, %cst_12 {dimension_numbers = #tpu.dot_dimension_numbers<[1], [0], [0], [1], [0, 0, 1, 1], [], []>} : vector<16x128xbf16>, vector<128x32xbf16>, vector<16x32xf32> -> vector<16x32xf32>
    %c0_13 = arith.constant 0 : index
    %c0_14 = arith.constant 0 : index
    %c0_15 = arith.constant 0 : index
    %16 = vector.load %arg8[%c0_13, %c0_14, %c0_15] : memref<1x1x32xf32, #tpu.memory_space<vmem>>, vector<1x1x32xf32>
    %17 = vector.shape_cast %16 : vector<1x1x32xf32> to vector<1x32xf32>
    %18 = vector.broadcast %17 : vector<1x32xf32> to vector<16x32xf32>
    %19 = arith.addf %15, %18 : vector<16x32xf32>
    %c0_16 = arith.constant 0 : index
    %c0_17 = arith.constant 0 : index
    %c0_18 = arith.constant 0 : index
    %20 = vector.load %arg5[%c0_16, %c0_17, %c0_18] : memref<1x128x32xbf16, #tpu.memory_space<vmem>>, vector<1x128x32xbf16>
    %21 = vector.shape_cast %20 : vector<1x128x32xbf16> to vector<128x32xbf16>
    %cst_19 = arith.constant dense<0.000000e+00> : vector<16x32xf32>
    %22 = tpu.matmul %5, %21, %cst_19 {dimension_numbers = #tpu.dot_dimension_numbers<[1], [0], [0], [1], [0, 0, 1, 1], [], []>} : vector<16x128xbf16>, vector<128x32xbf16>, vector<16x32xf32> -> vector<16x32xf32>
    %c0_20 = arith.constant 0 : index
    %c0_21 = arith.constant 0 : index
    %c0_22 = arith.constant 0 : index
    %23 = vector.load %arg9[%c0_20, %c0_21, %c0_22] : memref<1x1x32xf32, #tpu.memory_space<vmem>>, vector<1x1x32xf32>
    %24 = vector.shape_cast %23 : vector<1x1x32xf32> to vector<1x32xf32>
    %25 = vector.broadcast %24 : vector<1x32xf32> to vector<16x32xf32>
    %26 = arith.addf %22, %25 : vector<16x32xf32>
    %cst_23 = arith.constant 0.176776692 : f32
    %27 = vector.broadcast %cst_23 : f32 to vector<16x32xf32>
    %28 = arith.mulf %12, %27 : vector<16x32xf32>
    %29 = arith.truncf %28 : vector<16x32xf32> to vector<16x32xbf16>
    %30 = arith.truncf %19 : vector<16x32xf32> to vector<16x32xbf16>
    %31 = arith.truncf %26 : vector<16x32xf32> to vector<16x32xbf16>
    %cst_24 = arith.constant dense<0.000000e+00> : vector<16x16xf32>
    %32 = tpu.matmul %29, %30, %cst_24 {dimension_numbers = #tpu.dot_dimension_numbers<[1], [1], [0], [0], [0, 0, 1, 0], [], []>} : vector<16x32xbf16>, vector<16x32xbf16>, vector<16x16xf32> -> vector<16x16xf32>
    %c0_25 = arith.constant 0 : index
    %c0_26 = arith.constant 0 : index
    %c0_27 = arith.constant 0 : index
    %33 = vector.load %arg11[%c0_25, %c0_26, %c0_27] : memref<1x16x16xf32, #tpu.memory_space<vmem>>, vector<1x16x16xf32>
    %34 = vector.shape_cast %33 : vector<1x16x16xf32> to vector<16x16xf32>
    %35 = arith.addf %32, %34 : vector<16x16xf32>
    %cst_28 = arith.constant dense<0xFF800000> : vector<16xf32>
    %36 = vector.multi_reduction <maximumf>, %35, %cst_28 [1] : vector<16x16xf32> to vector<16xf32>
    %37 = vector.shape_cast %36 : vector<16xf32> to vector<16x1xf32>
    %38 = vector.broadcast %37 : vector<16x1xf32> to vector<16x16xf32>
    %39 = arith.subf %35, %38 : vector<16x16xf32>
    %40 = math.exp %39 : vector<16x16xf32>
    %cst_29 = arith.constant dense<0.000000e+00> : vector<16xf32>
    %41 = vector.multi_reduction <add>, %40, %cst_29 [1] : vector<16x16xf32> to vector<16xf32>
    %42 = vector.shape_cast %41 : vector<16xf32> to vector<16x1xf32>
    %43 = tpu.reciprocal %42 {approx = true} : vector<16x1xf32> -> vector<16x1xf32>
    %44 = vector.broadcast %43 : vector<16x1xf32> to vector<16x16xf32>
    %45 = arith.mulf %40, %44 : vector<16x16xf32>
    %46 = arith.truncf %45 : vector<16x16xf32> to vector<16x16xbf16>
    %cst_30 = arith.constant dense<0.000000e+00> : vector<16x32xf32>
    %47 = tpu.matmul %46, %31, %cst_30 {dimension_numbers = #tpu.dot_dimension_numbers<[1], [0], [0], [1], [0, 0, 1, 1], [], []>} : vector<16x16xbf16>, vector<16x32xbf16>, vector<16x32xf32> -> vector<16x32xf32>
    %c0_31 = arith.constant 0 : index
    %c0_32 = arith.constant 0 : index
    %48 = vector.load %arg15[%c0_31, %c0_32] : memref<16x128xf32, #tpu.memory_space<vmem>>, vector<16x128xf32>
    %49 = arith.truncf %47 : vector<16x32xf32> to vector<16x32xbf16>
    %c0_33 = arith.constant 0 : index
    %c0_34 = arith.constant 0 : index
    %c0_35 = arith.constant 0 : index
    %50 = vector.load %arg6[%c0_33, %c0_34, %c0_35] : memref<1x32x128xbf16, #tpu.memory_space<vmem>>, vector<1x32x128xbf16>
    %51 = vector.shape_cast %50 : vector<1x32x128xbf16> to vector<32x128xbf16>
    %cst_36 = arith.constant dense<0.000000e+00> : vector<16x128xf32>
    %52 = tpu.matmul %49, %51, %cst_36 {dimension_numbers = #tpu.dot_dimension_numbers<[1], [0], [0], [1], [0, 0, 1, 1], [], []>} : vector<16x32xbf16>, vector<32x128xbf16>, vector<16x128xf32> -> vector<16x128xf32>
    %53 = arith.addf %48, %52 : vector<16x128xf32>
    %c0_37 = arith.constant 0 : index
    %c0_38 = arith.constant 0 : index
    %54 = vector.load %arg15[%c0_37, %c0_38] : memref<16x128xf32, #tpu.memory_space<vmem>>, vector<16x128xf32>
    tpu.vector_store %arg15[%c0_37, %c0_38], %53 {strides = array<i32>} : memref<16x128xf32, #tpu.memory_space<vmem>>, vector<16x128xf32>,
    %c3_i32 = arith.constant 3 : i32
    %55 = arith.cmpi eq, %arg1, %c3_i32 : i32
    %56 = arith.extui %55 : i1 to i32
    %c0_i32_39 = arith.constant 0 : i32
    %57 = arith.cmpi ne, %56, %c0_i32_39 : i32
    scf.if %57 {
      %c0_40 = arith.constant 0 : index
      %c0_41 = arith.constant 0 : index
      %58 = vector.load %arg15[%c0_40, %c0_41] : memref<16x128xf32, #tpu.memory_space<vmem>>, vector<16x128xf32>
      %59 = arith.addf %4, %58 : vector<16x128xf32>
      %c0_42 = arith.constant 0 : index
      %c0_43 = arith.constant 0 : index
      %60 = vector.load %arg10[%c0_42, %c0_43] : memref<1x128xf32, #tpu.memory_space<vmem>>, vector<1x128xf32>
      %61 = vector.broadcast %60 : vector<1x128xf32> to vector<16x128xf32>
      %62 = arith.addf %59, %61 : vector<16x128xf32>
      %cst_44 = arith.constant dense<0.000000e+00> : vector<16xf32>
      %63 = vector.multi_reduction <add>, %62, %cst_44 [1] : vector<16x128xf32> to vector<16xf32>
      %64 = vector.shape_cast %63 : vector<16xf32> to vector<16x1xf32>
      %cst_45 = arith.constant 1.280000e+02 : f32
      %65 = vector.broadcast %cst_45 : f32 to vector<16x1xf32>
      %66 = arith.divf %64, %65 : vector<16x1xf32>
      %67 = vector.broadcast %66 : vector<16x1xf32> to vector<16x128xf32>
      %68 = arith.subf %62, %67 : vector<16x128xf32>
      %69 = arith.mulf %68, %68 : vector<16x128xf32>
      %cst_46 = arith.constant dense<0.000000e+00> : vector<16xf32>
      %70 = vector.multi_reduction <add>, %69, %cst_46 [1] : vector<16x128xf32> to vector<16xf32>
      %71 = vector.shape_cast %70 : vector<16xf32> to vector<16x1xf32>
      %cst_47 = arith.constant 1.280000e+02 : f32
      %72 = vector.broadcast %cst_47 : f32 to vector<16x1xf32>
      %73 = arith.divf %71, %72 : vector<16x1xf32>
      %cst_48 = arith.constant 9.99999974E-6 : f32
      %74 = vector.broadcast %cst_48 : f32 to vector<16x1xf32>
      %75 = arith.addf %73, %74 : vector<16x1xf32>
      %76 = math.rsqrt %75 : vector<16x1xf32>
      %77 = vector.broadcast %76 : vector<16x1xf32> to vector<16x128xf32>
      %78 = arith.mulf %68, %77 : vector<16x128xf32>
      %c0_49 = arith.constant 0 : index
      %c0_50 = arith.constant 0 : index
      %79 = vector.load %arg12[%c0_49, %c0_50] : memref<1x128xf32, #tpu.memory_space<vmem>>, vector<1x128xf32>
      %80 = vector.broadcast %79 : vector<1x128xf32> to vector<16x128xf32>
      %81 = arith.mulf %78, %80 : vector<16x128xf32>
      %c0_51 = arith.constant 0 : index
      %c0_52 = arith.constant 0 : index
      %82 = vector.load %arg13[%c0_51, %c0_52] : memref<1x128xf32, #tpu.memory_space<vmem>>, vector<1x128xf32>
      %83 = vector.broadcast %82 : vector<1x128xf32> to vector<16x128xf32>
      %84 = arith.addf %81, %83 : vector<16x128xf32>
      %c0_53 = arith.constant 0 : index
      %c0_54 = arith.constant 0 : index
      %c0_55 = arith.constant 0 : index
      %85 = vector.load %arg14[%c0_53, %c0_54, %c0_55] : memref<1x16x128xf32, #tpu.memory_space<vmem>>, vector<1x16x128xf32>
      %86 = vector.shape_cast %85 : vector<1x16x128xf32> to vector<16x128xf32>
      %87 = vector.shape_cast %84 : vector<16x128xf32> to vector<1x16x128xf32>
      tpu.vector_store %arg14[%c0_53, %c0_54, %c0_55], %87 {strides = array<i32>} : memref<1x16x128xf32, #tpu.memory_space<vmem>>, vector<1x16x128xf32>,
    } else {
    }
    return
  }
  func.func @transform_0(%arg0: i32, %arg1: i32) -> (i32, i32, i32) {
    %c0_i32 = arith.constant 0 : i32
    %c0_i32_0 = arith.constant 0 : i32
    %c0_i32_1 = arith.constant 0 : i32
    return %arg0, %c0_i32, %c0_i32_0 : i32, i32, i32
  }
  func.func @transform_1(%arg0: i32, %arg1: i32) -> (i32, i32, i32) {
    %c0_i32 = arith.constant 0 : i32
    %c0_i32_0 = arith.constant 0 : i32
    %c0_i32_1 = arith.constant 0 : i32
    return %arg1, %c0_i32, %c0_i32_0 : i32, i32, i32
  }
  func.func @transform_2(%arg0: i32, %arg1: i32) -> (i32, i32, i32) {
    %c0_i32 = arith.constant 0 : i32
    %c0_i32_0 = arith.constant 0 : i32
    %c0_i32_1 = arith.constant 0 : i32
    return %arg1, %c0_i32, %c0_i32_0 : i32, i32, i32
  }
  func.func @transform_3(%arg0: i32, %arg1: i32) -> (i32, i32, i32) {
    %c0_i32 = arith.constant 0 : i32
    %c0_i32_0 = arith.constant 0 : i32
    %c0_i32_1 = arith.constant 0 : i32
    return %arg1, %c0_i32, %c0_i32_0 : i32, i32, i32
  }
  func.func @transform_4(%arg0: i32, %arg1: i32) -> (i32, i32, i32) {
    %c0_i32 = arith.constant 0 : i32
    %c0_i32_0 = arith.constant 0 : i32
    %c0_i32_1 = arith.constant 0 : i32
    return %arg1, %c0_i32, %c0_i32_0 : i32, i32, i32
  }
  func.func @transform_5(%arg0: i32, %arg1: i32) -> (i32, i32, i32) {
    %c0_i32 = arith.constant 0 : i32
    %c0_i32_0 = arith.constant 0 : i32
    %c0_i32_1 = arith.constant 0 : i32
    return %arg1, %c0_i32, %c0_i32_0 : i32, i32, i32
  }
  func.func @transform_6(%arg0: i32, %arg1: i32) -> (i32, i32, i32) {
    %c0_i32 = arith.constant 0 : i32
    %c0_i32_0 = arith.constant 0 : i32
    %c0_i32_1 = arith.constant 0 : i32
    return %arg1, %c0_i32, %c0_i32_0 : i32, i32, i32
  }
  func.func @transform_7(%arg0: i32, %arg1: i32) -> (i32, i32, i32) {
    %c0_i32 = arith.constant 0 : i32
    %c0_i32_0 = arith.constant 0 : i32
    %c0_i32_1 = arith.constant 0 : i32
    return %arg1, %c0_i32, %c0_i32_0 : i32, i32, i32
  }
  func.func @transform_8(%arg0: i32, %arg1: i32) -> (i32, i32) {
    %c0_i32 = arith.constant 0 : i32
    %c0_i32_0 = arith.constant 0 : i32
    %c0_i32_1 = arith.constant 0 : i32
    return %c0_i32, %c0_i32_0 : i32, i32
  }
  func.func @transform_9(%arg0: i32, %arg1: i32) -> (i32, i32, i32) {
    %c0_i32 = arith.constant 0 : i32
    %c0_i32_0 = arith.constant 0 : i32
    %c0_i32_1 = arith.constant 0 : i32
    return %arg1, %c0_i32, %c0_i32_0 : i32, i32, i32
  }
  func.func @transform_10(%arg0: i32, %arg1: i32) -> (i32, i32) {
    %c0_i32 = arith.constant 0 : i32
    %c0_i32_0 = arith.constant 0 : i32
    %c0_i32_1 = arith.constant 0 : i32
    return %c0_i32, %c0_i32_0 : i32, i32
  }
  func.func @transform_11(%arg0: i32, %arg1: i32) -> (i32, i32) {
    %c0_i32 = arith.constant 0 : i32
    %c0_i32_0 = arith.constant 0 : i32
    %c0_i32_1 = arith.constant 0 : i32
    return %c0_i32, %c0_i32_0 : i32, i32
  }
  func.func @transform_12(%arg0: i32, %arg1: i32) -> (i32, i32, i32) {
    %c0_i32 = arith.constant 0 : i32
    %c0_i32_0 = arith.constant 0 : i32
    %c0_i32_1 = arith.constant 0 : i32
    return %arg0, %c0_i32, %c0_i32_0 : i32, i32, i32
  }
}

</mosaic_0001>

<llo_original>
// kernel: tpu_custom_call.1
$region0: #{tpu_custom_call.1}
  #allocation0 [shape = 'u32[]', space=smem, size = 0x4, offset = 0x4, fixed_abs, tag = 'smem constant byte address 0x4 - core index']
  #allocation1 [shape = 'u32[144,128]{1,0:T(1,128)}', space=vmem, size = 0x12000, scoped, tag = 'internal scratch']
  #allocation2 [shape = 'f32[16,128]{1,0:T(8,128)}', space=vmem, size = 0x2000, scoped, tag = 'scratch operand']
  %s0 = inlined_call_operand.vmem [shape: f32[2,16,128], index: 0, kind: input, shape index: {}]
  %s1 = inlined_call_operand.vmem [shape: bf16[4,128,32], index: 1, kind: input, shape index: {}]
  %s2 = inlined_call_operand.vmem [shape: bf16[4,128,32], index: 2, kind: input, shape index: {}]
  %s3 = inlined_call_operand.vmem [shape: bf16[4,128,32], index: 3, kind: input, shape index: {}]
  %s4 = inlined_call_operand.vmem [shape: bf16[4,32,128], index: 4, kind: input, shape index: {}]
  %s5 = inlined_call_operand.vmem [shape: f32[4,1,32], index: 5, kind: input, shape index: {}]
  %s6 = inlined_call_operand.vmem [shape: f32[4,1,32], index: 6, kind: input, shape index: {}]
  %s7 = inlined_call_operand.vmem [shape: f32[4,1,32], index: 7, kind: input, shape index: {}]
  %s8 = inlined_call_operand.vmem [shape: f32[1,128], index: 8, kind: input, shape index: {}]
  %s9 = inlined_call_operand.vmem [shape: f32[4,16,16], index: 9, kind: input, shape index: {}]
  %s10 = inlined_call_operand.vmem [shape: f32[1,128], index: 10, kind: input, shape index: {}]
  %s11 = inlined_call_operand.vmem [shape: f32[1,128], index: 11, kind: input, shape index: {}]
  %s12 = inlined_call_operand.hbm [shape: f32[2,16,128], index: 12, kind: output, shape index: {}]
  %s13 = sld [smem:[#allocation0]]
  $region89: #{tpu_custom_call.1} parent=0
    _
  %s15 = ssub.s32 1, %s13
  %s16 = scalar_select 0, %s15, %s13
  $region1: #{tpu_custom_call.1} parent=0
    #allocation3 [shape = 'u8[16384]{0}', space=vmem, size = 0x4000, scoped, tag = 'output window, operand 0']
    #allocation4 [shape = 's32[2]{0}', space=sflag, size = 0x8, scoped, tag = 'scoped memory for tpu_custom_call.1']
    %17 = vsyncpa [#allocation4], 0
    %s18 = scalar_lea.sflag [#allocation4], 1
    %19 = vsyncpa %s18, 0
    loop: start=0, step=1, limit=10
    $region2: #{tpu_custom_call.1} parent=1 // loop_pre_header
      _
    $region3: #{tpu_custom_call.1} parent=1 // loop_header
      %s21 = sphi 0, %s25
      %p22 = scmp.ge.s32.totalorder %s21, 10
      %s28 = sphi 0, %s40
      %s29 = sphi 0, %s36
      %s30 = sphi 0, %s28
      %s31 = sphi 0, %s29
      %s32 = sphi 0, %s30
      %s33 = sphi 0, %s31
      %s43 = sphi 0, %s45
      %s46 = sphi 0, %s43
      %s47 = sphi 0, %s46
      %s63 = sphi 0, %s47
      %s69 = sphi 0, %s71
      %s72 = sphi 0, %s69
      %s73 = sphi 0, %s72
      %s89 = sphi 0, %s73
      %s95 = sphi 0, %s97
      %s98 = sphi 0, %s95
      %s99 = sphi 0, %s98
      %s115 = sphi 0, %s99
      %s121 = sphi 0, %s123
      %s124 = sphi 0, %s121
      %s125 = sphi 0, %s124
      %s141 = sphi 0, %s125
      %s147 = sphi 0, %s149
      %s150 = sphi 0, %s147
      %s151 = sphi 0, %s150
      %s167 = sphi 0, %s151
      %s173 = sphi 0, %s175
      %s176 = sphi 0, %s173
      %s177 = sphi 0, %s176
      %s193 = sphi 0, %s177
      %s199 = sphi 0, %s201
      %s202 = sphi 0, %s199
      %s203 = sphi 0, %s202
      %s219 = sphi 0, %s203
      %s225 = sphi 0, %s227
      %s228 = sphi 0, %s225
      %s229 = sphi 0, %s228
      %s245 = sphi 0, %s229
      %s249 = sphi 0, %s249
      %s251 = sphi 0, %s249
      %s252 = sphi 0, %s251
      %s266 = sphi 0, %s252
      %s272 = sphi 0, %s274
      %s275 = sphi 0, %s272
      %s276 = sphi 0, %s275
      %s292 = sphi 0, %s276
      %s296 = sphi 0, %s296
      %s298 = sphi 0, %s296
      %s299 = sphi 0, %s298
      %s313 = sphi 0, %s299
      %s317 = sphi 0, %s317
      %s319 = sphi 0, %s317
      %s320 = sphi 0, %s319
      %s334 = sphi 0, %s320
      %s340 = sphi 0, %s342
      %s343 = sphi 0, %s340
      %s344 = sphi 0, %s343
      %s360 = sphi 0, %s344
    $region4: #{tpu_custom_call.1} parent=1 // loop_header_branch
      %24 = sbr.rel (%p22) target = $region8
    $region5: #{tpu_custom_call.1} parent=1 // loop_body
      %s26 = ssub.s32 %s21, 1
      %s27 = ssub.s32 %s21, 2
      %s34 = sadd.s32 1, %s29
      %p35 = scmp.ge.s32.totalorder %s34, 4
      %s36 = scalar_select %p35, 0, %s34
      %s37 = sadd.s32 1, %s28
      %s38 = scalar_select %p35, %s37, %s28
      %p39 = scmp.ge.s32.totalorder %s38, 2
      %s40 = scalar_select %p39, 0, %s38
      %s41 = ssub.s32 %s28, %s40
      %p42 = scmp.eq.s32.totalorder %s41, 0
      %s44 = sadd.s32 %s43, 1
      %s45 = scalar_select %p42, %s43, %s44
      %p48 = pneg %p42
      %p49 = scmp.eq.s32.totalorder %s21, 7
      %p50 = por %p48, %p49
      %p51 = scmp.ne.s32.totalorder %s43, %s46
      %p52 = scmp.eq.s32.totalorder %s21, 0
      %p53 = por %p51, %p52
      %p54 = scmp.ne.s32.totalorder %s43, %s46
      %p55 = scmp.eq.s32.totalorder %s26, 7
      %p56 = por %p54, %p55
      %p57 = scmp.ne.s32.totalorder %s46, %s47
      %p58 = scmp.eq.s32.totalorder %s26, 0
      %p59 = por %p57, %p58
      %p60 = scmp.ne.s32.totalorder %s46, %s47
      %p61 = scmp.eq.s32.totalorder %s27, 7
      %p62 = por %p60, %p61
      %p64 = scmp.ne.s32.totalorder %s47, %s63
      %p65 = scmp.eq.s32.totalorder %s27, 0
      %p66 = por %p64, %p65
      %s67 = ssub.s32 %s29, %s36
      %p68 = scmp.eq.s32.totalorder %s67, 0
      %s70 = sadd.s32 %s69, 1
      %s71 = scalar_select %p68, %s69, %s70
      %p74 = pneg %p68
      %p75 = scmp.eq.s32.totalorder %s21, 7
      %p76 = por %p74, %p75
      %p77 = scmp.ne.s32.totalorder %s69, %s72
      %p78 = scmp.eq.s32.totalorder %s21, 0
      %p79 = por %p77, %p78
      %p80 = scmp.ne.s32.totalorder %s69, %s72
      %p81 = scmp.eq.s32.totalorder %s26, 7
      %p82 = por %p80, %p81
      %p83 = scmp.ne.s32.totalorder %s72, %s73
      %p84 = scmp.eq.s32.totalorder %s26, 0
      %p85 = por %p83, %p84
      %p86 = scmp.ne.s32.totalorder %s72, %s73
      %p87 = scmp.eq.s32.totalorder %s27, 7
      %p88 = por %p86, %p87
      %p90 = scmp.ne.s32.totalorder %s73, %s89
      %p91 = scmp.eq.s32.totalorder %s27, 0
      %p92 = por %p90, %p91
      %s93 = ssub.s32 %s29, %s36
      %p94 = scmp.eq.s32.totalorder %s93, 0
      %s96 = sadd.s32 %s95, 1
      %s97 = scalar_select %p94, %s95, %s96
      %p100 = pneg %p94
      %p101 = scmp.eq.s32.totalorder %s21, 7
      %p102 = por %p100, %p101
      %p103 = scmp.ne.s32.totalorder %s95, %s98
      %p104 = scmp.eq.s32.totalorder %s21, 0
      %p105 = por %p103, %p104
      %p106 = scmp.ne.s32.totalorder %s95, %s98
      %p107 = scmp.eq.s32.totalorder %s26, 7
      %p108 = por %p106, %p107
      %p109 = scmp.ne.s32.totalorder %s98, %s99
      %p110 = scmp.eq.s32.totalorder %s26, 0
      %p111 = por %p109, %p110
      %p112 = scmp.ne.s32.totalorder %s98, %s99
      %p113 = scmp.eq.s32.totalorder %s27, 7
      %p114 = por %p112, %p113
      %p116 = scmp.ne.s32.totalorder %s99, %s115
      %p117 = scmp.eq.s32.totalorder %s27, 0
      %p118 = por %p116, %p117
      %s119 = ssub.s32 %s29, %s36
      %p120 = scmp.eq.s32.totalorder %s119, 0
      %s122 = sadd.s32 %s121, 1
      %s123 = scalar_select %p120, %s121, %s122
      %p126 = pneg %p120
      %p127 = scmp.eq.s32.totalorder %s21, 7
      %p128 = por %p126, %p127
      %p129 = scmp.ne.s32.totalorder %s121, %s124
      %p130 = scmp.eq.s32.totalorder %s21, 0
      %p131 = por %p129, %p130
      %p132 = scmp.ne.s32.totalorder %s121, %s124
      %p133 = scmp.eq.s32.totalorder %s26, 7
      %p134 = por %p132, %p133
      %p135 = scmp.ne.s32.totalorder %s124, %s125
      %p136 = scmp.eq.s32.totalorder %s26, 0
      %p137 = por %p135, %p136
      %p138 = scmp.ne.s32.totalorder %s124, %s125
      %p139 = scmp.eq.s32.totalorder %s27, 7
      %p140 = por %p138, %p139
      %p142 = scmp.ne.s32.totalorder %s125, %s141
      %p143 = scmp.eq.s32.totalorder %s27, 0
      %p144 = por %p142, %p143
      %s145 = ssub.s32 %s29, %s36
      %p146 = scmp.eq.s32.totalorder %s145, 0
      %s148 = sadd.s32 %s147, 1
      %s149 = scalar_select %p146, %s147, %s148
      %p152 = pneg %p146
      %p153 = scmp.eq.s32.totalorder %s21, 7
      %p154 = por %p152, %p153
      %p155 = scmp.ne.s32.totalorder %s147, %s150
      %p156 = scmp.eq.s32.totalorder %s21, 0
      %p157 = por %p155, %p156
      %p158 = scmp.ne.s32.totalorder %s147, %s150
      %p159 = scmp.eq.s32.totalorder %s26, 7
      %p160 = por %p158, %p159
      %p161 = scmp.ne.s32.totalorder %s150, %s151
      %p162 = scmp.eq.s32.totalorder %s26, 0
      %p163 = por %p161, %p162
      %p164 = scmp.ne.s32.totalorder %s150, %s151
      %p165 = scmp.eq.s32.totalorder %s27, 7
      %p166 = por %p164, %p165
      %p168 = scmp.ne.s32.totalorder %s151, %s167
      %p169 = scmp.eq.s32.totalorder %s27, 0
      %p170 = por %p168, %p169
      %s171 = ssub.s32 %s29, %s36
      %p172 = scmp.eq.s32.totalorder %s171, 0
      %s174 = sadd.s32 %s173, 1
      %s175 = scalar_select %p172, %s173, %s174
      %p178 = pneg %p172
      %p179 = scmp.eq.s32.totalorder %s21, 7
      %p180 = por %p178, %p179
      %p181 = scmp.ne.s32.totalorder %s173, %s176
      %p182 = scmp.eq.s32.totalorder %s21, 0
      %p183 = por %p181, %p182
      %p184 = scmp.ne.s32.totalorder %s173, %s176
      %p185 = scmp.eq.s32.totalorder %s26, 7
      %p186 = por %p184, %p185
      %p187 = scmp.ne.s32.totalorder %s176, %s177
      %p188 = scmp.eq.s32.totalorder %s26, 0
      %p189 = por %p187, %p188
      %p190 = scmp.ne.s32.totalorder %s176, %s177
      %p191 = scmp.eq.s32.totalorder %s27, 7
      %p192 = por %p190, %p191
      %p194 = scmp.ne.s32.totalorder %s177, %s193
      %p195 = scmp.eq.s32.totalorder %s27, 0
      %p196 = por %p194, %p195
      %s197 = ssub.s32 %s29, %s36
      %p198 = scmp.eq.s32.totalorder %s197, 0
      %s200 = sadd.s32 %s199, 1
      %s201 = scalar_select %p198, %s199, %s200
      %p204 = pneg %p198
      %p205 = scmp.eq.s32.totalorder %s21, 7
      %p206 = por %p204, %p205
      %p207 = scmp.ne.s32.totalorder %s199, %s202
      %p208 = scmp.eq.s32.totalorder %s21, 0
      %p209 = por %p207, %p208
      %p210 = scmp.ne.s32.totalorder %s199, %s202
      %p211 = scmp.eq.s32.totalorder %s26, 7
      %p212 = por %p210, %p211
      %p213 = scmp.ne.s32.totalorder %s202, %s203
      %p214 = scmp.eq.s32.totalorder %s26, 0
      %p215 = por %p213, %p214
      %p216 = scmp.ne.s32.totalorder %s202, %s203
      %p217 = scmp.eq.s32.totalorder %s27, 7
      %p218 = por %p216, %p217
      %p220 = scmp.ne.s32.totalorder %s203, %s219
      %p221 = scmp.eq.s32.totalorder %s27, 0
      %p222 = por %p220, %p221
      %s223 = ssub.s32 %s29, %s36
      %p224 = scmp.eq.s32.totalorder %s223, 0
      %s226 = sadd.s32 %s225, 1
      %s227 = scalar_select %p224, %s225, %s226
      %p230 = pneg %p224
      %p231 = scmp.eq.s32.totalorder %s21, 7
      %p232 = por %p230, %p231
      %p233 = scmp.ne.s32.totalorder %s225, %s228
      %p234 = scmp.eq.s32.totalorder %s21, 0
      %p235 = por %p233, %p234
      %p236 = scmp.ne.s32.totalorder %s225, %s228
      %p237 = scmp.eq.s32.totalorder %s26, 7
      %p238 = por %p236, %p237
      %p239 = scmp.ne.s32.totalorder %s228, %s229
      %p240 = scmp.eq.s32.totalorder %s26, 0
      %p241 = por %p239, %p240
      %p242 = scmp.ne.s32.totalorder %s228, %s229
      %p243 = scmp.eq.s32.totalorder %s27, 7
      %p244 = por %p242, %p243
      %p246 = scmp.ne.s32.totalorder %s229, %s245
      %p247 = scmp.eq.s32.totalorder %s27, 0
      %p248 = por %p246, %p247
      %s250 = sadd.s32 %s249, 1
      %p253 = scmp.eq.s32.totalorder %s21, 7
      %p254 = scmp.ne.s32.totalorder %s249, %s251
      %p255 = scmp.eq.s32.totalorder %s21, 0
      %p256 = por %p254, %p255
      %p257 = scmp.ne.s32.totalorder %s249, %s251
      %p258 = scmp.eq.s32.totalorder %s26, 7
      %p259 = por %p257, %p258
      %p260 = scmp.ne.s32.totalorder %s251, %s252
      %p261 = scmp.eq.s32.totalorder %s26, 0
      %p262 = por %p260, %p261
      %p263 = scmp.ne.s32.totalorder %s251, %s252
      %p264 = scmp.eq.s32.totalorder %s27, 7
      %p265 = por %p263, %p264
      %p267 = scmp.ne.s32.totalorder %s252, %s266
      %p268 = scmp.eq.s32.totalorder %s27, 0
      %p269 = por %p267, %p268
      %s270 = ssub.s32 %s29, %s36
      %p271 = scmp.eq.s32.totalorder %s270, 0
      %s273 = sadd.s32 %s272, 1
      %s274 = scalar_select %p271, %s272, %s273
      %p277 = pneg %p271
      %p278 = scmp.eq.s32.totalorder %s21, 7
      %p279 = por %p277, %p278
      %p280 = scmp.ne.s32.totalorder %s272, %s275
      %p281 = scmp.eq.s32.totalorder %s21, 0
      %p282 = por %p280, %p281
      %p283 = scmp.ne.s32.totalorder %s272, %s275
      %p284 = scmp.eq.s32.totalorder %s26, 7
      %p285 = por %p283, %p284
      %p286 = scmp.ne.s32.totalorder %s275, %s276
      %p287 = scmp.eq.s32.totalorder %s26, 0
      %p288 = por %p286, %p287
      %p289 = scmp.ne.s32.totalorder %s275, %s276
      %p290 = scmp.eq.s32.totalorder %s27, 7
      %p291 = por %p289, %p290
      %p293 = scmp.ne.s32.totalorder %s276, %s292
      %p294 = scmp.eq.s32.totalorder %s27, 0
      %p295 = por %p293, %p294
      %s297 = sadd.s32 %s296, 1
      %p300 = scmp.eq.s32.totalorder %s21, 7
      %p301 = scmp.ne.s32.totalorder %s296, %s298
      %p302 = scmp.eq.s32.totalorder %s21, 0
      %p303 = por %p301, %p302
      %p304 = scmp.ne.s32.totalorder %s296, %s298
      %p305 = scmp.eq.s32.totalorder %s26, 7
      %p306 = por %p304, %p305
      %p307 = scmp.ne.s32.totalorder %s298, %s299
      %p308 = scmp.eq.s32.totalorder %s26, 0
      %p309 = por %p307, %p308
      %p310 = scmp.ne.s32.totalorder %s298, %s299
      %p311 = scmp.eq.s32.totalorder %s27, 7
      %p312 = por %p310, %p311
      %p314 = scmp.ne.s32.totalorder %s299, %s313
      %p315 = scmp.eq.s32.totalorder %s27, 0
      %p316 = por %p314, %p315
      %s318 = sadd.s32 %s317, 1
      %p321 = scmp.eq.s32.totalorder %s21, 7
      %p322 = scmp.ne.s32.totalorder %s317, %s319
      %p323 = scmp.eq.s32.totalorder %s21, 0
      %p324 = por %p322, %p323
      %p325 = scmp.ne.s32.totalorder %s317, %s319
      %p326 = scmp.eq.s32.totalorder %s26, 7
      %p327 = por %p325, %p326
      %p328 = scmp.ne.s32.totalorder %s319, %s320
      %p329 = scmp.eq.s32.totalorder %s26, 0
      %p330 = por %p328, %p329
      %p331 = scmp.ne.s32.totalorder %s319, %s320
      %p332 = scmp.eq.s32.totalorder %s27, 7
      %p333 = por %p331, %p332
      %p335 = scmp.ne.s32.totalorder %s320, %s334
      %p336 = scmp.eq.s32.totalorder %s27, 0
      %p337 = por %p335, %p336
      %s338 = ssub.s32 %s28, %s40
      %p339 = scmp.eq.s32.totalorder %s338, 0
      %s341 = sadd.s32 %s340, 1
      %s342 = scalar_select %p339, %s340, %s341
      %p345 = pneg %p339
      %p346 = scmp.eq.s32.totalorder %s21, 7
      %p347 = por %p345, %p346
      %p348 = scmp.ne.s32.totalorder %s340, %s343
      %p349 = scmp.eq.s32.totalorder %s21, 0
      %p350 = por %p348, %p349
      %p351 = scmp.ne.s32.totalorder %s340, %s343
      %p352 = scmp.eq.s32.totalorder %s26, 7
      %p353 = por %p351, %p352
      %p354 = scmp.ne.s32.totalorder %s343, %s344
      %p355 = scmp.eq.s32.totalorder %s26, 0
      %p356 = por %p354, %p355
      %p357 = scmp.ne.s32.totalorder %s343, %s344
      %p358 = scmp.eq.s32.totalorder %s27, 7
      %p359 = por %p357, %p358
      %p361 = scmp.ne.s32.totalorder %s344, %s360
      %p362 = scmp.eq.s32.totalorder %s27, 0
      %p363 = por %p361, %p362
      %p364 = scmp.le.s32.totalorder 1, %s21
      %p365 = scmp.lt.s32.totalorder %s21, 9
      %p366 = pnand %p364, %p365
      %p367 = pneg %p366
      // Predicated region
      $region9: #{tpu_custom_call.1} parent=5 // pred_check
        _
      $region10: #{tpu_custom_call.1} parent=5 // pred_check_branch
        %369 = sbr.rel (%p366) target = $region12
      $region11: #{tpu_custom_call.1} parent=5 // pred_region
        %s370 = ssub.s32 %s21, 1
        // Predicated region
        $region13: #{tpu_custom_call.1} parent=11 // pred_check
          %p371 = pneg %p262
        $region14: #{tpu_custom_call.1} parent=11 // pred_check_branch
          %373 = sbr.rel (%p371) target = $region16
        $region15: #{tpu_custom_call.1} parent=11 // pred_region
          _
        $region16: #{tpu_custom_call.1} parent=11 // pred_fallthru
          _
        // Predicated region
        $region17: #{tpu_custom_call.1} parent=11 // pred_check
          %p374 = pneg %p309
        $region18: #{tpu_custom_call.1} parent=11 // pred_check_branch
          %376 = sbr.rel (%p374) target = $region20
        $region19: #{tpu_custom_call.1} parent=11 // pred_region
          _
        $region20: #{tpu_custom_call.1} parent=11 // pred_fallthru
          _
        // Predicated region
        $region21: #{tpu_custom_call.1} parent=11 // pred_check
          %p377 = pneg %p330
        $region22: #{tpu_custom_call.1} parent=11 // pred_check_branch
          %379 = sbr.rel (%p377) target = $region24
        $region23: #{tpu_custom_call.1} parent=11 // pred_region
          _
        $region24: #{tpu_custom_call.1} parent=11 // pred_fallthru
          _
      $region12: #{tpu_custom_call.1} parent=5 // pred_fallthru
        _
      %p380 = scmp.lt.s32.totalorder %s21, 8
      // Predicated region
      $region25: #{tpu_custom_call.1} parent=5 // pred_check
        %p381 = pneg %p380
      $region26: #{tpu_custom_call.1} parent=5 // pred_check_branch
        %383 = sbr.rel (%p381) target = $region28
      $region27: #{tpu_custom_call.1} parent=5 // pred_region
        // Predicated region
        $region29: #{tpu_custom_call.1} parent=27 // pred_check
          %p384 = pneg %p53
        $region30: #{tpu_custom_call.1} parent=27 // pred_check_branch
          %386 = sbr.rel (%p384) target = $region32
        $region31: #{tpu_custom_call.1} parent=27 // pred_region
          %p387 = scmp.lt.s32.totalorder %s28, 1
          %s388 = scalar_select %p387, %s28, 1
          %s389 = smul.addr %s388, 2
          %s390 = smul.addr %s389, 8
          %s391 = scalar_lea.vmem %s0, %s390
        $region32: #{tpu_custom_call.1} parent=27 // pred_fallthru
          _
        // Predicated region
        $region33: #{tpu_custom_call.1} parent=27 // pred_check
          %p392 = pneg %p79
        $region34: #{tpu_custom_call.1} parent=27 // pred_check_branch
          %394 = sbr.rel (%p392) target = $region36
        $region35: #{tpu_custom_call.1} parent=27 // pred_region
          %p395 = scmp.lt.s32.totalorder %s29, 3
          %s396 = scalar_select %p395, %s29, 3
          %s397 = smul.addr %s396, 16
          %s398 = smul.addr %s397, 4
          %s399 = scalar_lea.vmem %s1, %s398
        $region36: #{tpu_custom_call.1} parent=27 // pred_fallthru
          _
        // Predicated region
        $region37: #{tpu_custom_call.1} parent=27 // pred_check
          %p400 = pneg %p105
        $region38: #{tpu_custom_call.1} parent=27 // pred_check_branch
          %402 = sbr.rel (%p400) target = $region40
        $region39: #{tpu_custom_call.1} parent=27 // pred_region
          %p403 = scmp.lt.s32.totalorder %s29, 3
          %s404 = scalar_select %p403, %s29, 3
          %s405 = smul.addr %s404, 16
          %s406 = smul.addr %s405, 4
          %s407 = scalar_lea.vmem %s2, %s406
        $region40: #{tpu_custom_call.1} parent=27 // pred_fallthru
          _
        // Predicated region
        $region41: #{tpu_custom_call.1} parent=27 // pred_check
          %p408 = pneg %p131
        $region42: #{tpu_custom_call.1} parent=27 // pred_check_branch
          %410 = sbr.rel (%p408) target = $region44
        $region43: #{tpu_custom_call.1} parent=27 // pred_region
          %p411 = scmp.lt.s32.totalorder %s29, 3
          %s412 = scalar_select %p411, %s29, 3
          %s413 = smul.addr %s412, 16
          %s414 = smul.addr %s413, 4
          %s415 = scalar_lea.vmem %s3, %s414
        $region44: #{tpu_custom_call.1} parent=27 // pred_fallthru
          _
        // Predicated region
        $region45: #{tpu_custom_call.1} parent=27 // pred_check
          %p416 = pneg %p157
        $region46: #{tpu_custom_call.1} parent=27 // pred_check_branch
          %418 = sbr.rel (%p416) target = $region48
        $region47: #{tpu_custom_call.1} parent=27 // pred_region
          %p419 = scmp.lt.s32.totalorder %s29, 3
          %s420 = scalar_select %p419, %s29, 3
          %s421 = smul.addr %s420, 4
          %s422 = smul.addr %s421, 4
          %s423 = scalar_lea.vmem %s4, %s422
        $region48: #{tpu_custom_call.1} parent=27 // pred_fallthru
          _
        // Predicated region
        $region49: #{tpu_custom_call.1} parent=27 // pred_check
          %p424 = pneg %p183
        $region50: #{tpu_custom_call.1} parent=27 // pred_check_branch
          %426 = sbr.rel (%p424) target = $region52
        $region51: #{tpu_custom_call.1} parent=27 // pred_region
          %p427 = scmp.lt.s32.totalorder %s29, 3
          %s428 = scalar_select %p427, %s29, 3
          %s429 = scalar_lea.vmem %s5, %s428
        $region52: #{tpu_custom_call.1} parent=27 // pred_fallthru
          _
        // Predicated region
        $region53: #{tpu_custom_call.1} parent=27 // pred_check
          %p430 = pneg %p209
        $region54: #{tpu_custom_call.1} parent=27 // pred_check_branch
          %432 = sbr.rel (%p430) target = $region56
        $region55: #{tpu_custom_call.1} parent=27 // pred_region
          %p433 = scmp.lt.s32.totalorder %s29, 3
          %s434 = scalar_select %p433, %s29, 3
          %s435 = scalar_lea.vmem %s6, %s434
        $region56: #{tpu_custom_call.1} parent=27 // pred_fallthru
          _
        // Predicated region
        $region57: #{tpu_custom_call.1} parent=27 // pred_check
          %p436 = pneg %p235
        $region58: #{tpu_custom_call.1} parent=27 // pred_check_branch
          %438 = sbr.rel (%p436) target = $region60
        $region59: #{tpu_custom_call.1} parent=27 // pred_region
          %p439 = scmp.lt.s32.totalorder %s29, 3
          %s440 = scalar_select %p439, %s29, 3
          %s441 = scalar_lea.vmem %s7, %s440
        $region60: #{tpu_custom_call.1} parent=27 // pred_fallthru
          _
        // Predicated region
        $region61: #{tpu_custom_call.1} parent=27 // pred_check
          %p442 = pneg %p282
        $region62: #{tpu_custom_call.1} parent=27 // pred_check_branch
          %444 = sbr.rel (%p442) target = $region64
        $region63: #{tpu_custom_call.1} parent=27 // pred_region
          %p445 = scmp.lt.s32.totalorder %s29, 3
          %s446 = scalar_select %p445, %s29, 3
          %s447 = smul.addr %s446, 2
          %s448 = smul.addr %s447, 8
          %s449 = scalar_lea.vmem %s9, %s448
        $region64: #{tpu_custom_call.1} parent=27 // pred_fallthru
          _
      $region28: #{tpu_custom_call.1} parent=5 // pred_fallthru
        _
      %p450 = scmp.le.s32.totalorder 1, %s21
      %p451 = scmp.lt.s32.totalorder %s21, 9
      %p452 = pnand %p450, %p451
      %p453 = pneg %p452
      // Predicated region
      $region65: #{tpu_custom_call.1} parent=5 // pred_check
        _
      $region66: #{tpu_custom_call.1} parent=5 // pred_check_branch
        %455 = sbr.rel (%p452) target = $region68
      $region67: #{tpu_custom_call.1} parent=5 // pred_region
        %s456 = ssub.s32 %s21, 1
        %p457 = scmp.lt.s32.totalorder %s30, 1
        %s458 = scalar_select %p457, %s30, 1
        %s459 = smul.addr %s458, 2
        %s460 = smul.addr %s459, 8
        %s461 = scalar_lea.vmem %s0, %s460
        %p462 = pneg %p59
        %p463 = pneg %p56
        %p464 = scmp.lt.s32.totalorder %s31, 3
        %s465 = scalar_select %p464, %s31, 3
        %s466 = smul.addr %s465, 16
        %s467 = smul.addr %s466, 4
        %s468 = scalar_lea.vmem %s1, %s467
        %p469 = pneg %p85
        %p470 = pneg %p82
        %p471 = scmp.lt.s32.totalorder %s31, 3
        %s472 = scalar_select %p471, %s31, 3
        %s473 = smul.addr %s472, 16
        %s474 = smul.addr %s473, 4
        %s475 = scalar_lea.vmem %s2, %s474
        %p476 = pneg %p111
        %p477 = pneg %p108
        %p478 = scmp.lt.s32.totalorder %s31, 3
        %s479 = scalar_select %p478, %s31, 3
        %s480 = smul.addr %s479, 16
        %s481 = smul.addr %s480, 4
        %s482 = scalar_lea.vmem %s3, %s481
        %p483 = pneg %p137
        %p484 = pneg %p134
        %p485 = scmp.lt.s32.totalorder %s31, 3
        %s486 = scalar_select %p485, %s31, 3
        %s487 = smul.addr %s486, 4
        %s488 = smul.addr %s487, 4
        %s489 = scalar_lea.vmem %s4, %s488
        %p490 = pneg %p163
        %p491 = pneg %p160
        %p492 = scmp.lt.s32.totalorder %s31, 3
        %s493 = scalar_select %p492, %s31, 3
        %s494 = scalar_lea.vmem %s5, %s493
        %p495 = pneg %p189
        %p496 = pneg %p186
        %p497 = scmp.lt.s32.totalorder %s31, 3
        %s498 = scalar_select %p497, %s31, 3
        %s499 = scalar_lea.vmem %s6, %s498
        %p500 = pneg %p215
        %p501 = pneg %p212
        %p502 = scmp.lt.s32.totalorder %s31, 3
        %s503 = scalar_select %p502, %s31, 3
        %s504 = scalar_lea.vmem %s7, %s503
        %p505 = pneg %p241
        %p506 = pneg %p238
        %p507 = pneg %p262
        %p508 = pneg %p259
        %p509 = scmp.lt.s32.totalorder %s31, 3
        %s510 = scalar_select %p509, %s31, 3
        %s511 = smul.addr %s510, 2
        %s512 = smul.addr %s511, 8
        %s513 = scalar_lea.vmem %s9, %s512
        %p514 = pneg %p288
        %p515 = pneg %p285
        %p516 = pneg %p309
        %p517 = pneg %p306
        %p518 = pneg %p330
        %p519 = pneg %p327
        %p520 = pneg %p356
        %p521 = pneg %p353
        %s522 = sand.u32 %s343, 1
        %s523 = scalar_lea.sflag [#allocation4], %s522
        %s524 = sand.u32 %s343, 1
        %s525 = smul.addr %s524, 16
        %s526 = scalar_lea.vmem [#allocation3], %s525
        %p527 = scmp.lt.s32.totalorder %s30, 1
        %s528 = scalar_select %p527, %s30, 1
        %s529 = smul.addr %s528, 2
        %s530 = smul.addr %s529, 8
        %s531 = scalar_lea.vmem %s0, %s530
        %p532 = scmp.lt.s32.totalorder %s31, 3
        %s533 = scalar_select %p532, %s31, 3
        %s534 = smul.addr %s533, 16
        %s535 = smul.addr %s534, 4
        %s536 = scalar_lea.vmem %s1, %s535
        %p537 = scmp.lt.s32.totalorder %s31, 3
        %s538 = scalar_select %p537, %s31, 3
        %s539 = smul.addr %s538, 16
        %s540 = smul.addr %s539, 4
        %s541 = scalar_lea.vmem %s2, %s540
        %p542 = scmp.lt.s32.totalorder %s31, 3
        %s543 = scalar_select %p542, %s31, 3
        %s544 = smul.addr %s543, 16
        %s545 = smul.addr %s544, 4
        %s546 = scalar_lea.vmem %s3, %s545
        %p547 = scmp.lt.s32.totalorder %s31, 3
        %s548 = scalar_select %p547, %s31, 3
        %s549 = smul.addr %s548, 4
        %s550 = smul.addr %s549, 4
        %s551 = scalar_lea.vmem %s4, %s550
        %p552 = scmp.lt.s32.totalorder %s31, 3
        %s553 = scalar_select %p552, %s31, 3
        %s554 = scalar_lea.vmem %s5, %s553
        %p555 = scmp.lt.s32.totalorder %s31, 3
        %s556 = scalar_select %p555, %s31, 3
        %s557 = scalar_lea.vmem %s6, %s556
        %p558 = scmp.lt.s32.totalorder %s31, 3
        %s559 = scalar_select %p558, %s31, 3
        %s560 = scalar_lea.vmem %s7, %s559
        %p561 = scmp.lt.s32.totalorder %s31, 3
        %s562 = scalar_select %p561, %s31, 3
        %s563 = smul.addr %s562, 2
        %s564 = smul.addr %s563, 8
        %s565 = scalar_lea.vmem %s9, %s564
        %p567 = scmp.eq.s32.totalorder %s31, 0
        // Predicated region
        $region69: #{tpu_custom_call.1} parent=67 // pred_check
          %p568 = pneg %p567
        $region70: #{tpu_custom_call.1} parent=67 // pred_check_branch
          %570 = sbr.rel (%p568) target = $region72
        $region71: #{tpu_custom_call.1} parent=67 // pred_region
          %571 = vst [vmem:[#allocation2] sm:$0xff] 0.0
          %572 = vst [vmem:[#allocation2 + $0x8] sm:$0xff] 0.0
        $region72: #{tpu_custom_call.1} parent=67 // pred_fallthru
          _
        %v573 = vld [vmem:[%s531] sm:$0xff]
        %v574 = vld [vmem:[%s531 + $0x8] sm:$0xff]
        %v575 = vpack.c.bf16 %v574, %v573
        %v576 = vld [vmem:[%s536] sm:$0xf]
        %v577 = vld [vmem:[%s536 + $0x4] sm:$0xf]
        %v578 = vld [vmem:[%s536 + $0x8] sm:$0xf]
        %v579 = vld [vmem:[%s536 + $0xc] sm:$0xf]
        %v580 = vld [vmem:[%s536 + $0x10] sm:$0xf]
        %v581 = vld [vmem:[%s536 + $0x14] sm:$0xf]
        %v582 = vld [vmem:[%s536 + $0x18] sm:$0xf]
        %v583 = vld [vmem:[%s536 + $0x1c] sm:$0xf]
        %v584 = vld [vmem:[%s536 + $0x20] sm:$0xf]
        %v585 = vld [vmem:[%s536 + $0x24] sm:$0xf]
        %v586 = vld [vmem:[%s536 + $0x28] sm:$0xf]
        %v587 = vld [vmem:[%s536 + $0x2c] sm:$0xf]
        %v588 = vld [vmem:[%s536 + $0x30] sm:$0xf]
        %v589 = vld [vmem:[%s536 + $0x34] sm:$0xf]
        %v590 = vld [vmem:[%s536 + $0x38] sm:$0xf]
        %v591 = vld [vmem:[%s536 + $0x3c] sm:$0xf]
        %v592 = vld [vmem:[%s554] sm:$0x1]
        %v594 = vlaneseq
        %v595 = vshrl.u32 %v594, 7
        %v596 = vsub.s32 0, %v595
        %v597 = vrot.slane %v592, %v596
        %v615 = vunpack.c.l.b16 %v576
        %v616 = vunpack.c.l.b16 %v577
        %v617 = vunpack.c.l.b16 %v578
        %v618 = vunpack.c.l.b16 %v579
        %v619 = vunpack.c.l.b16 %v580
        %v620 = vunpack.c.l.b16 %v581
        %v621 = vunpack.c.l.b16 %v582
        %v622 = vunpack.c.l.b16 %v583
        %v623 = vunpack.c.l.b16 %v584
        %v624 = vunpack.c.l.b16 %v585
        %v625 = vunpack.c.l.b16 %v586
        %v626 = vunpack.c.l.b16 %v587
        %v627 = vunpack.c.l.b16 %v588
        %v628 = vunpack.c.l.b16 %v589
        %v629 = vunpack.c.l.b16 %v590
        %v630 = vunpack.c.l.b16 %v591
        %v631 = vpack.c.b16 %v616, %v615
        %v632 = vpack.c.b16 %v618, %v617
        %v633 = vpack.c.b16 %v620, %v619
        %v634 = vpack.c.b16 %v622, %v621
        %v635 = vpack.c.b16 %v624, %v623
        %v636 = vpack.c.b16 %v626, %v625
        %v637 = vpack.c.b16 %v628, %v627
        %v638 = vpack.c.b16 %v630, %v629
        %647 = vmatprep.subr.bf16.mxu0 0
        %648 = vmatpush1.bf16.msra.mxu0 %v631
        %649 = vmatprep.subr.bf16.mxu0 0
        %650 = vmatpush1.bf16.msra.mxu0 %v632
        %651 = vmatprep.subr.bf16.mxu0 0
        %652 = vmatpush1.bf16.msra.mxu0 %v633
        %653 = vmatprep.subr.bf16.mxu0 0
        %654 = vmatpush1.bf16.msra.mxu0 %v634
        %655 = vmatprep.subr.bf16.mxu0 0
        %656 = vmatpush1.bf16.msra.mxu0 %v635
        %657 = vmatprep.subr.bf16.mxu0 0
        %658 = vmatpush1.bf16.msra.mxu0 %v636
        %659 = vmatprep.subr.bf16.mxu0 0
        %660 = vmatpush1.bf16.msra.mxu0 %v637
        %661 = vmatprep.subr.bf16.mxu0 0
        %662 = vmatpush1.bf16.msra.mxu0 %v638
        %663 = vmatprep.subr.bf16.mxu0 0
        %664 = vmatpush1.bf16.msra.mxu0 0
        %665 = vmatprep.subr.bf16.mxu0 0
        %666 = vmatpush1.bf16.msra.mxu0 0
        %667 = vmatprep.subr.bf16.mxu0 0
        %668 = vmatpush1.bf16.msra.mxu0 0
        %669 = vmatprep.subr.bf16.mxu0 0
        %670 = vmatpush1.bf16.msra.mxu0 0
        %671 = vmatprep.subr.bf16.mxu0 0
        %672 = vmatpush1.bf16.msra.mxu0 0
        %673 = vmatprep.subr.bf16.mxu0 0
        %674 = vmatpush1.bf16.msra.mxu0 0
        %675 = vmatprep.subr.bf16.mxu0 0
        %676 = vmatpush1.bf16.msra.mxu0 0
        %677 = vmatprep.subr.bf16.mxu0 0
        %678 = vmatpush1.bf16.msra.mxu0 0
        %679 = vmatprep.mubr.bf16.mxu0 0
        %680 = vmatmul.mubr.bf16.gmra.mrb[0].mxu0 %v575
        %v681 = vpop.f32.mrb[0].mxu0
        %v682 = vadd.f32 %v597, %v681
        %v683 = vpop.f32.mrb[0].mxu0
        %v684 = vpop.f32.mrb[0].mxu0
        %v685 = vadd.f32 %v597, %v684
        %v686 = vpop.f32.mrb[0].mxu0
        %687 = vdwg.mxu0
        %v688 = vld [vmem:[%s541] sm:$0xf]
        %v689 = vld [vmem:[%s541 + $0x4] sm:$0xf]
        %v690 = vld [vmem:[%s541 + $0x8] sm:$0xf]
        %v691 = vld [vmem:[%s541 + $0xc] sm:$0xf]
        %v692 = vld [vmem:[%s541 + $0x10] sm:$0xf]
        %v693 = vld [vmem:[%s541 + $0x14] sm:$0xf]
        %v694 = vld [vmem:[%s541 + $0x18] sm:$0xf]
        %v695 = vld [vmem:[%s541 + $0x1c] sm:$0xf]
        %v696 = vld [vmem:[%s541 + $0x20] sm:$0xf]
        %v697 = vld [vmem:[%s541 + $0x24] sm:$0xf]
        %v698 = vld [vmem:[%s541 + $0x28] sm:$0xf]
        %v699 = vld [vmem:[%s541 + $0x2c] sm:$0xf]
        %v700 = vld [vmem:[%s541 + $0x30] sm:$0xf]
        %v701 = vld [vmem:[%s541 + $0x34] sm:$0xf]
        %v702 = vld [vmem:[%s541 + $0x38] sm:$0xf]
        %v703 = vld [vmem:[%s541 + $0x3c] sm:$0xf]
        %v704 = vld [vmem:[%s557] sm:$0x1]
        %v706 = vlaneseq
        %v707 = vshrl.u32 %v706, 7
        %v708 = vsub.s32 0, %v707
        %v709 = vrot.slane %v704, %v708
        %v727 = vunpack.c.l.b16 %v688
        %v728 = vunpack.c.l.b16 %v689
        %v729 = vunpack.c.l.b16 %v690
        %v730 = vunpack.c.l.b16 %v691
        %v731 = vunpack.c.l.b16 %v692
        %v732 = vunpack.c.l.b16 %v693
        %v733 = vunpack.c.l.b16 %v694
        %v734 = vunpack.c.l.b16 %v695
        %v735 = vunpack.c.l.b16 %v696
        %v736 = vunpack.c.l.b16 %v697
        %v737 = vunpack.c.l.b16 %v698
        %v738 = vunpack.c.l.b16 %v699
        %v739 = vunpack.c.l.b16 %v700
        %v740 = vunpack.c.l.b16 %v701
        %v741 = vunpack.c.l.b16 %v702
        %v742 = vunpack.c.l.b16 %v703
        %v743 = vpack.c.b16 %v728, %v727
        %v744 = vpack.c.b16 %v730, %v729
        %v745 = vpack.c.b16 %v732, %v731
        %v746 = vpack.c.b16 %v734, %v733
        %v747 = vpack.c.b16 %v736, %v735
        %v748 = vpack.c.b16 %v738, %v737
        %v749 = vpack.c.b16 %v740, %v739
        %v750 = vpack.c.b16 %v742, %v741
        %759 = vmatprep.subr.bf16.mxu0 0
        %760 = vmatpush1.bf16.msra.mxu0 %v743
        %761 = vmatprep.subr.bf16.mxu0 0
        %762 = vmatpush1.bf16.msra.mxu0 %v744
        %763 = vmatprep.subr.bf16.mxu0 0
        %764 = vmatpush1.bf16.msra.mxu0 %v745
        %765 = vmatprep.subr.bf16.mxu0 0
        %766 = vmatpush1.bf16.msra.mxu0 %v746
        %767 = vmatprep.subr.bf16.mxu0 0
        %768 = vmatpush1.bf16.msra.mxu0 %v747
        %769 = vmatprep.subr.bf16.mxu0 0
        %770 = vmatpush1.bf16.msra.mxu0 %v748
        %771 = vmatprep.subr.bf16.mxu0 0
        %772 = vmatpush1.bf16.msra.mxu0 %v749
        %773 = vmatprep.subr.bf16.mxu0 0
        %774 = vmatpush1.bf16.msra.mxu0 %v750
        %775 = vmatprep.subr.bf16.mxu0 0
        %776 = vmatpush1.bf16.msra.mxu0 0
        %777 = vmatprep.subr.bf16.mxu0 0
        %778 = vmatpush1.bf16.msra.mxu0 0
        %779 = vmatprep.subr.bf16.mxu0 0
        %780 = vmatpush1.bf16.msra.mxu0 0
        %781 = vmatprep.subr.bf16.mxu0 0
        %782 = vmatpush1.bf16.msra.mxu0 0
        %783 = vmatprep.subr.bf16.mxu0 0
        %784 = vmatpush1.bf16.msra.mxu0 0
        %785 = vmatprep.subr.bf16.mxu0 0
        %786 = vmatpush1.bf16.msra.mxu0 0
        %787 = vmatprep.subr.bf16.mxu0 0
        %788 = vmatpush1.bf16.msra.mxu0 0
        %789 = vmatprep.subr.bf16.mxu0 0
        %790 = vmatpush1.bf16.msra.mxu0 0
        %791 = vmatprep.mubr.bf16.mxu0 0
        %792 = vmatmul.mubr.bf16.gmra.mrb[0].mxu0 %v575
        %v793 = vpop.f32.mrb[0].mxu0
        %v794 = vadd.f32 %v709, %v793
        %v795 = vpop.f32.mrb[0].mxu0
        %v796 = vpop.f32.mrb[0].mxu0
        %v797 = vadd.f32 %v709, %v796
        %v798 = vpop.f32.mrb[0].mxu0
        %799 = vdwg.mxu0
        %v800 = vld [vmem:[%s546] sm:$0xf]
        %v801 = vld [vmem:[%s546 + $0x4] sm:$0xf]
        %v802 = vld [vmem:[%s546 + $0x8] sm:$0xf]
        %v803 = vld [vmem:[%s546 + $0xc] sm:$0xf]
        %v804 = vld [vmem:[%s546 + $0x10] sm:$0xf]
        %v805 = vld [vmem:[%s546 + $0x14] sm:$0xf]
        %v806 = vld [vmem:[%s546 + $0x18] sm:$0xf]
        %v807 = vld [vmem:[%s546 + $0x1c] sm:$0xf]
        %v808 = vld [vmem:[%s546 + $0x20] sm:$0xf]
        %v809 = vld [vmem:[%s546 + $0x24] sm:$0xf]
        %v810 = vld [vmem:[%s546 + $0x28] sm:$0xf]
        %v811 = vld [vmem:[%s546 + $0x2c] sm:$0xf]
        %v812 = vld [vmem:[%s546 + $0x30] sm:$0xf]
        %v813 = vld [vmem:[%s546 + $0x34] sm:$0xf]
        %v814 = vld [vmem:[%s546 + $0x38] sm:$0xf]
        %v815 = vld [vmem:[%s546 + $0x3c] sm:$0xf]
        %v816 = vld [vmem:[%s560] sm:$0x1]
        %v818 = vlaneseq
        %v819 = vshrl.u32 %v818, 7
        %v820 = vsub.s32 0, %v819
        %v821 = vrot.slane %v816, %v820
        %v839 = vunpack.c.l.b16 %v800
        %v840 = vunpack.c.l.b16 %v801
        %v841 = vunpack.c.l.b16 %v802
        %v842 = vunpack.c.l.b16 %v803
        %v843 = vunpack.c.l.b16 %v804
        %v844 = vunpack.c.l.b16 %v805
        %v845 = vunpack.c.l.b16 %v806
        %v846 = vunpack.c.l.b16 %v807
        %v847 = vunpack.c.l.b16 %v808
        %v848 = vunpack.c.l.b16 %v809
        %v849 = vunpack.c.l.b16 %v810
        %v850 = vunpack.c.l.b16 %v811
        %v851 = vunpack.c.l.b16 %v812
        %v852 = vunpack.c.l.b16 %v813
        %v853 = vunpack.c.l.b16 %v814
        %v854 = vunpack.c.l.b16 %v815
        %v855 = vpack.c.b16 %v840, %v839
        %v856 = vpack.c.b16 %v842, %v841
        %v857 = vpack.c.b16 %v844, %v843
        %v858 = vpack.c.b16 %v846, %v845
        %v859 = vpack.c.b16 %v848, %v847
        %v860 = vpack.c.b16 %v850, %v849
        %v861 = vpack.c.b16 %v852, %v851
        %v862 = vpack.c.b16 %v854, %v853
        %871 = vmatprep.subr.bf16.mxu0 0
        %872 = vmatpush1.bf16.msra.mxu0 %v855
        %873 = vmatprep.subr.bf16.mxu0 0
        %874 = vmatpush1.bf16.msra.mxu0 %v856
        %875 = vmatprep.subr.bf16.mxu0 0
        %876 = vmatpush1.bf16.msra.mxu0 %v857
        %877 = vmatprep.subr.bf16.mxu0 0
        %878 = vmatpush1.bf16.msra.mxu0 %v858
        %879 = vmatprep.subr.bf16.mxu0 0
        %880 = vmatpush1.bf16.msra.mxu0 %v859
        %881 = vmatprep.subr.bf16.mxu0 0
        %882 = vmatpush1.bf16.msra.mxu0 %v860
        %883 = vmatprep.subr.bf16.mxu0 0
        %884 = vmatpush1.bf16.msra.mxu0 %v861
        %885 = vmatprep.subr.bf16.mxu0 0
        %886 = vmatpush1.bf16.msra.mxu0 %v862
        %887 = vmatprep.subr.bf16.mxu0 0
        %888 = vmatpush1.bf16.msra.mxu0 0
        %889 = vmatprep.subr.bf16.mxu0 0
        %890 = vmatpush1.bf16.msra.mxu0 0
        %891 = vmatprep.subr.bf16.mxu0 0
        %892 = vmatpush1.bf16.msra.mxu0 0
        %893 = vmatprep.subr.bf16.mxu0 0
        %894 = vmatpush1.bf16.msra.mxu0 0
        %895 = vmatprep.subr.bf16.mxu0 0
        %896 = vmatpush1.bf16.msra.mxu0 0
        %897 = vmatprep.subr.bf16.mxu0 0
        %898 = vmatpush1.bf16.msra.mxu0 0
        %899 = vmatprep.subr.bf16.mxu0 0
        %900 = vmatpush1.bf16.msra.mxu0 0
        %901 = vmatprep.subr.bf16.mxu0 0
        %902 = vmatpush1.bf16.msra.mxu0 0
        %903 = vmatprep.mubr.bf16.mxu0 0
        %904 = vmatmul.mubr.bf16.gmra.mrb[0].mxu0 %v575
        %v905 = vpop.f32.mrb[0].mxu0
        %v906 = vadd.f32 %v821, %v905
        %v907 = vpop.f32.mrb[0].mxu0
        %v908 = vpop.f32.mrb[0].mxu0
        %v909 = vadd.f32 %v821, %v908
        %v910 = vpop.f32.mrb[0].mxu0
        %911 = vdwg.mxu0
        %v912 = vmul.f32 %v682, 0.17677669
        %v913 = vmul.f32 %v685, 0.17677669
        %v914 = vpack.c.bf16 %v913, %v912
        %v915 = vpack.c.bf16 %v797, %v794
        %v916 = vpack.c.bf16 %v909, %v906
        %v917 = vld [vmem:[%s565] sm:$0xff]
        %v918 = vld [vmem:[%s565 + $0x8] sm:$0xff]
        %vm919 = vcmask 261120
        %v921 = vsel %vm919, %v914, 0
        %v924 = vsel %vm919, %v915, 0
        %926 = vmatprep.subr.bf16.mxu0 0
        %927 = vmatpush1.bf16.xpose.msra.mxu0 %v924
        %928 = vmatprep.subr.bf16.mxu0 0
        %929 = vmatpush1.bf16.xpose.msra.mxu0 0
        %930 = vmatprep.subr.bf16.mxu0 0
        %931 = vmatpush1.bf16.xpose.msra.mxu0 0
        %932 = vmatprep.subr.bf16.mxu0 0
        %933 = vmatpush1.bf16.xpose.msra.mxu0 0
        %934 = vmatprep.subr.bf16.mxu0 0
        %935 = vmatpush1.bf16.xpose.msra.mxu0 0
        %936 = vmatprep.subr.bf16.mxu0 0
        %937 = vmatpush1.bf16.xpose.msra.mxu0 0
        %938 = vmatprep.subr.bf16.mxu0 0
        %939 = vmatpush1.bf16.xpose.msra.mxu0 0
        %940 = vmatprep.subr.bf16.mxu0 0
        %941 = vmatpush1.bf16.xpose.msra.mxu0 0
        %942 = vmatprep.subr.bf16.mxu0 0
        %943 = vmatpush1.bf16.xpose.msra.mxu0 0
        %944 = vmatprep.subr.bf16.mxu0 0
        %945 = vmatpush1.bf16.xpose.msra.mxu0 0
        %946 = vmatprep.subr.bf16.mxu0 0
        %947 = vmatpush1.bf16.xpose.msra.mxu0 0
        %948 = vmatprep.subr.bf16.mxu0 0
        %949 = vmatpush1.bf16.xpose.msra.mxu0 0
        %950 = vmatprep.subr.bf16.mxu0 0
        %951 = vmatpush1.bf16.xpose.msra.mxu0 0
        %952 = vmatprep.subr.bf16.mxu0 0
        %953 = vmatpush1.bf16.xpose.msra.mxu0 0
        %954 = vmatprep.subr.bf16.mxu0 0
        %955 = vmatpush1.bf16.xpose.msra.mxu0 0
        %956 = vmatprep.subr.bf16.mxu0 0
        %957 = vmatpush1.bf16.xpose.msra.mxu0 0
        %958 = vmatprep.mubr.bf16.mxu0 0
        %959 = vmatmul.mubr.bf16.gmra.mrb[0].mxu0 %v921
        %v960 = vpop.f32.mrb[0].mxu0
        %v961 = vadd.f32 %v917, %v960
        %v962 = vpop.f32.mrb[0].mxu0
        %v963 = vpop.f32.mrb[0].mxu0
        %v964 = vadd.f32 %v918, %v963
        %v965 = vpop.f32.mrb[0].mxu0
        %966 = vdwg.mxu0
        %vm967 = vcmask 130048
        %v968 = vsel %vm967, %v961, -inf
        %969 = vmax.xlane.f32.xlu0 %v968
        %v970 = vpop.xlane.xlu0 %969
        %v971 = vsel %vm967, %v964, -inf
        %972 = vmax.xlane.f32.xlu0 %v971
        %v973 = vpop.xlane.xlu0 %972
        %v974 = vsub.f32 %v961, %v970
        %v975 = vsub.f32 %v964, %v973
        %v976 = vmul.f32 %v974, 1.442695
        %v977 = vpow.pop %v976
        %v978 = vmul.f32 %v975, 1.442695
        %v979 = vpow.pop %v978
        %v980 = vsel %vm967, %v977, 0.0
        %981 = vadd.xlane.f32.xlu0 %v980
        %v982 = vpop.xlane.xlu0 %981
        %v983 = vsel %vm967, %v979, 0.0
        %984 = vadd.xlane.f32.xlu0 %v983
        %v985 = vpop.xlane.xlu0 %984
        %v986 = vrcp.pop %v982
        %v987 = vrcp.pop %v985
        %v988 = vmul.f32 %v977, %v986
        %v989 = vmul.f32 %v979, %v987
        %v990 = vpack.c.bf16 %v989, %v988
        %v992 = vsel %vm967, %v990, 0
        %994 = vmatprep.subr.bf16.mxu0 0
        %995 = vmatpush1.bf16.msra.mxu0 %v916
        %996 = vmatprep.subr.bf16.mxu0 0
        %997 = vmatpush1.bf16.msra.mxu0 0
        %998 = vmatprep.subr.bf16.mxu0 0
        %999 = vmatpush1.bf16.msra.mxu0 0
        %1000 = vmatprep.subr.bf16.mxu0 0
        %1001 = vmatpush1.bf16.msra.mxu0 0
        %1002 = vmatprep.subr.bf16.mxu0 0
        %1003 = vmatpush1.bf16.msra.mxu0 0
        %1004 = vmatprep.subr.bf16.mxu0 0
        %1005 = vmatpush1.bf16.msra.mxu0 0
        %1006 = vmatprep.subr.bf16.mxu0 0
        %1007 = vmatpush1.bf16.msra.mxu0 0
        %1008 = vmatprep.subr.bf16.mxu0 0
        %1009 = vmatpush1.bf16.msra.mxu0 0
        %1010 = vmatprep.subr.bf16.mxu0 0
        %1011 = vmatpush1.bf16.msra.mxu0 0
        %1012 = vmatprep.subr.bf16.mxu0 0
        %1013 = vmatpush1.bf16.msra.mxu0 0
        %1014 = vmatprep.subr.bf16.mxu0 0
        %1015 = vmatpush1.bf16.msra.mxu0 0
        %1016 = vmatprep.subr.bf16.mxu0 0
        %1017 = vmatpush1.bf16.msra.mxu0 0
        %1018 = vmatprep.subr.bf16.mxu0 0
        %1019 = vmatpush1.bf16.msra.mxu0 0
        %1020 = vmatprep.subr.bf16.mxu0 0
        %1021 = vmatpush1.bf16.msra.mxu0 0
        %1022 = vmatprep.subr.bf16.mxu0 0
        %1023 = vmatpush1.bf16.msra.mxu0 0
        %1024 = vmatprep.subr.bf16.mxu0 0
        %1025 = vmatpush1.bf16.msra.mxu0 0
        %1026 = vmatprep.mubr.bf16.mxu0 0
        %1027 = vmatmul.mubr.bf16.gmra.mrb[0].mxu0 %v992
        %v1028 = vpop.f32.mrb[0].mxu0
        %v1029 = vadd.f32 0.0, %v1028
        %v1030 = vpop.f32.mrb[0].mxu0
        %v1031 = vpop.f32.mrb[0].mxu0
        %v1032 = vadd.f32 0.0, %v1031
        %v1033 = vpop.f32.mrb[0].mxu0
        %1034 = vdwg.mxu0
        %v1035 = vld [vmem:[#allocation2] sm:$0xff]
        %v1036 = vld [vmem:[#allocation2 + $0x8] sm:$0xff]
        %v1037 = vpack.c.bf16 %v1032, %v1029
        %v1038 = vld [vmem:[%s551] sm:$0xf]
        %v1039 = vld [vmem:[%s551 + $0x4] sm:$0xf]
        %v1040 = vld [vmem:[%s551 + $0x8] sm:$0xf]
        %v1041 = vld [vmem:[%s551 + $0xc] sm:$0xf]
        %v1046 = vunpack.c.l.b16 %v1038
        %v1047 = vunpack.c.l.b16 %v1039
        %v1048 = vunpack.c.l.b16 %v1040
        %v1049 = vunpack.c.l.b16 %v1041
        %v1050 = vpack.c.b16 %v1047, %v1046
        %v1051 = vpack.c.b16 %v1049, %v1048
        %v1055 = vsel %vm919, %v1037, 0
        %1057 = vmatprep.subr.bf16.mxu0 0
        %1058 = vmatpush1.bf16.msra.mxu0 %v1050
        %1059 = vmatprep.subr.bf16.mxu0 0
        %1060 = vmatpush1.bf16.msra.mxu0 %v1051
        %1061 = vmatprep.subr.bf16.mxu0 0
        %1062 = vmatpush1.bf16.msra.mxu0 0
        %1063 = vmatprep.subr.bf16.mxu0 0
        %1064 = vmatpush1.bf16.msra.mxu0 0
        %1065 = vmatprep.subr.bf16.mxu0 0
        %1066 = vmatpush1.bf16.msra.mxu0 0
        %1067 = vmatprep.subr.bf16.mxu0 0
        %1068 = vmatpush1.bf16.msra.mxu0 0
        %1069 = vmatprep.subr.bf16.mxu0 0
        %1070 = vmatpush1.bf16.msra.mxu0 0
        %1071 = vmatprep.subr.bf16.mxu0 0
        %1072 = vmatpush1.bf16.msra.mxu0 0
        %1073 = vmatprep.subr.bf16.mxu0 0
        %1074 = vmatpush1.bf16.msra.mxu0 0
        %1075 = vmatprep.subr.bf16.mxu0 0
        %1076 = vmatpush1.bf16.msra.mxu0 0
        %1077 = vmatprep.subr.bf16.mxu0 0
        %1078 = vmatpush1.bf16.msra.mxu0 0
        %1079 = vmatprep.subr.bf16.mxu0 0
        %1080 = vmatpush1.bf16.msra.mxu0 0
        %1081 = vmatprep.subr.bf16.mxu0 0
        %1082 = vmatpush1.bf16.msra.mxu0 0
        %1083 = vmatprep.subr.bf16.mxu0 0
        %1084 = vmatpush1.bf16.msra.mxu0 0
        %1085 = vmatprep.subr.bf16.mxu0 0
        %1086 = vmatpush1.bf16.msra.mxu0 0
        %1087 = vmatprep.subr.bf16.mxu0 0
        %1088 = vmatpush1.bf16.msra.mxu0 0
        %1089 = vmatprep.mubr.bf16.mxu0 0
        %1090 = vmatmul.mubr.bf16.gmra.mrb[0].mxu0 %v1055
        %v1091 = vpop.f32.mrb[0].mxu0
        %v1092 = vadd.f32 0.0, %v1091
        %v1093 = vpop.f32.mrb[0].mxu0
        %v1094 = vpop.f32.mrb[0].mxu0
        %v1095 = vadd.f32 0.0, %v1094
        %v1096 = vpop.f32.mrb[0].mxu0
        %1097 = vdwg.mxu0
        %v1098 = vadd.f32 %v1035, %v1092
        %v1099 = vadd.f32 %v1036, %v1095
        %1100 = vst [vmem:[#allocation2] sm:$0xff] %v1098
        %1101 = vst [vmem:[#allocation2 + $0x8] sm:$0xff] %v1099
        %p1102 = scmp.eq.s32.totalorder %s31, 3
        // Predicated region
        $region73: #{tpu_custom_call.1} parent=67 // pred_check
          %p1103 = pneg %p1102
        $region74: #{tpu_custom_call.1} parent=67 // pred_check_branch
          %1105 = sbr.rel (%p1103) target = $region76
        $region75: #{tpu_custom_call.1} parent=67 // pred_region
          %v1106 = vld [vmem:[#allocation2] sm:$0xff]
          %v1107 = vld [vmem:[#allocation2 + $0x8] sm:$0xff]
          %v1108 = vadd.f32 %v573, %v1106
          %v1109 = vadd.f32 %v574, %v1107
          %v1110 = vld [vmem:[%s8] sm:$0x1]
          %v1112 = vlaneseq
          %v1113 = vshrl.u32 %v1112, 7
          %v1114 = vsub.s32 0, %v1113
          %v1115 = vrot.slane %v1110, %v1114
          %v1117 = vadd.f32 %v1108, %v1115
          %v1118 = vadd.f32 %v1109, %v1115
          %1119 = vadd.xlane.f32.xlu0 %v1117
          %v1120 = vpop.xlane.xlu0 %1119
          %1121 = vadd.xlane.f32.xlu0 %v1118
          %v1122 = vpop.xlane.xlu0 %1121
          %v1123 = vrcp.pop 128.0
          %v1124 = vmul.f32 %v1120, %v1123
          %v1125 = vmul.f32 %v1122, %v1123
          %v1126 = vsub.f32 %v1117, %v1124
          %v1127 = vsub.f32 %v1118, %v1125
          %v1128 = vmul.f32 %v1126, %v1126
          %v1129 = vmul.f32 %v1127, %v1127
          %1130 = vadd.xlane.f32.xlu0 %v1128
          %v1131 = vpop.xlane.xlu0 %1130
          %1132 = vadd.xlane.f32.xlu0 %v1129
          %v1133 = vpop.xlane.xlu0 %1132
          %v1134 = vmul.f32 %v1131, %v1123
          %v1135 = vmul.f32 %v1133, %v1123
          %v1136 = vadd.f32 %v1134, 1e-05
          %v1137 = vadd.f32 %v1135, 1e-05
          %v1138 = vrsqrt.pop %v1136
          %v1139 = vrsqrt.pop %v1137
          %v1140 = vmul.f32 %v1126, %v1138
          %v1141 = vmul.f32 %v1127, %v1139
          %v1142 = vld [vmem:[%s10] sm:$0x1]
          %v1144 = vlaneseq
          %v1145 = vshrl.u32 %v1144, 7
          %v1146 = vsub.s32 0, %v1145
          %v1147 = vrot.slane %v1142, %v1146
          %v1149 = vmul.f32 %v1140, %v1147
          %v1150 = vmul.f32 %v1141, %v1147
          %v1151 = vld [vmem:[%s11] sm:$0x1]
          %v1153 = vlaneseq
          %v1154 = vshrl.u32 %v1153, 7
          %v1155 = vsub.s32 0, %v1154
          %v1156 = vrot.slane %v1151, %v1155
          %v1158 = vadd.f32 %v1149, %v1156
          %v1159 = vadd.f32 %v1150, %v1156
          %1160 = vst [vmem:[%s526] sm:$0xff] %v1158
          %1161 = vst [vmem:[%s526 + $0x8] sm:$0xff] %v1159
        $region76: #{tpu_custom_call.1} parent=67 // pred_fallthru
          _
        %s1162 = sand.u32 %s343, 1
        %s1163 = scalar_lea.sflag [#allocation4], %s1162
        %s1164 = sand.u32 %s343, 1
        %s1165 = smul.addr %s1164, 16
        %s1166 = scalar_lea.vmem [#allocation3], %s1165
        // Predicated region
        $region77: #{tpu_custom_call.1} parent=67 // pred_check
          %p1167 = pneg %p353
        $region78: #{tpu_custom_call.1} parent=67 // pred_check_branch
          %1169 = sbr.rel (%p1167) target = $region80
        $region79: #{tpu_custom_call.1} parent=67 // pred_region
          %s1171 = ssub.s32 256, 256
          %1172 = vsyncadd %s1163, %s1171
          %s1173 = smul.addr %s30, 2
          %s1174 = smul.addr %s1173, 128
          %s1175 = scalar_lea.hbm %s12, %s1174
          %s1176 = sshll.u32 %s1166, 4
          %s1177 = int_to_ptr.vmem [resolvable:$true] %s1176
          %1182 = dma.vmem_to_hbm [thread:$0]  %s1177, 256, %s1175, %s1163, 128, 128, 8
        $region80: #{tpu_custom_call.1} parent=67 // pred_fallthru
          _
      $region68: #{tpu_custom_call.1} parent=5 // pred_fallthru
        _
      %p1183 = scmp.le.s32.totalorder 2, %s21
      // Predicated region
      $region81: #{tpu_custom_call.1} parent=5 // pred_check
        %p1184 = pneg %p1183
      $region82: #{tpu_custom_call.1} parent=5 // pred_check_branch
        %1186 = sbr.rel (%p1184) target = $region84
      $region83: #{tpu_custom_call.1} parent=5 // pred_region
        %s1187 = ssub.s32 %s21, 2
        // Predicated region
        $region85: #{tpu_custom_call.1} parent=83 // pred_check
          %p1188 = pneg %p359
        $region86: #{tpu_custom_call.1} parent=83 // pred_check_branch
          %1190 = sbr.rel (%p1188) target = $region88
        $region87: #{tpu_custom_call.1} parent=83 // pred_region
          %s1191 = sand.u32 %s344, 1
          %s1192 = scalar_lea.sflag [#allocation4], %s1191
          %s1193 = sand.u32 %s344, 1
          %s1194 = smul.addr %s1193, 16
          %s1195 = scalar_lea.vmem [#allocation3], %s1194
          %1196 = dma.done %s1192, 256
        $region88: #{tpu_custom_call.1} parent=83 // pred_fallthru
          _
      $region84: #{tpu_custom_call.1} parent=5 // pred_fallthru
        _
    $region6: #{tpu_custom_call.1} parent=1 // loop_footer
      %s25 = sadd.s32 1, %s21
    $region7: #{tpu_custom_call.1} parent=1 // loop_footer_branch
      %20 = sbr.rel target = $region3
    $region8: #{tpu_custom_call.1} parent=1 // loop_exit
      _
    %1197 = vsyncpa [#allocation4], 1
    %s1198 = scalar_lea.sflag [#allocation4], 1
    %1199 = vsyncpa %s1198, 1

</llo_original>
